<compile_context>
chip_gen: v6e
topology: v6e:2x2x1
jax: 0.10.0
libtpu: 0.0.40
codegen_flags: <defaults>
</compile_context>

<pallas_src>
import functools

import numpy as np
import jax
import jax.numpy as jnp
from jax.experimental import pallas as pl
from jax.experimental.pallas import tpu as pltpu

# ----------------------------------------------------------------------------
# Shape constants (toy sizes consistent with the module)
# ----------------------------------------------------------------------------
H = W = 16            # input spatial size
CIN = 3               # input channels
CIN_PAD = 8           # padded input channels (K alignment)
FEAT_C = 32           # feature channels (resnet50 stand-in)
HO = WO = 8           # feature spatial size after stride-2 conv
S2D_G = 10            # space-to-depth grid height/width: (16 + 4 pad) / 2
S2D_C = 4 * CIN_PAD   # 32 channels after 2x2 space-to-depth
X_ROWS = S2D_G * S2D_G          # 100 flat s2d rows (row stride S2D_G)
F_ROWS = HO * S2D_G             # 80 feature acc rows (virtual width S2D_G)
FPW = HO + 2                    # 10: padded feature width for the decoder
FP_ROWS = 104                   # FPW*FPW = 100, + headroom for shifted reads
D_ROWS = 80                     # decoder acc rows (valid i*FPW+j <= 77)
COUT = 3                        # decoder output channels
GAZE_DIM = 2
GAZE_PAD = 128                  # lane-dense gaze output
IMG_LANES = 128                 # 4 parity phases x 32 padded channels
PHASE_C = IMG_LANES // 4        # 32 lanes per parity phase


# ----------------------------------------------------------------------------
# Fused Pallas kernel
# ----------------------------------------------------------------------------
def fused_kernel(x_ref, fw_ref, fb_ref, vm_ref, gw_ref, gb_ref, dw_ref, db_ref,
                 gaze_ref, img_ref, fp_ref, *, bt):
    """Fused feature conv + ReLU + GAP/FC gaze head + upsample/conv/sigmoid.

    x_ref   : [bt, X_ROWS, S2D_C] bf16   space-to-depth input (row stride S2D_G)
    fw_ref  : [128, FEAT_C]       bf16   K-combined 2x2-tap conv weights
    fb_ref  : [1, FEAT_C]         f32
    vm_ref  : [F_ROWS, 1]         f32    1.0 at valid feature rows, 0 at junk
    gw_ref  : [FEAT_C, GAZE_PAD]  bf16   gaze FC weights (1/64 GAP scale folded)
    gb_ref  : [1, GAZE_PAD]       f32
    dw_ref  : [288, IMG_LANES]    bf16   decoder weights, K = 9 shifts x 32 ch,
                                         lanes = phase*32 + cout
    db_ref  : [1, IMG_LANES]      f32
    gaze_ref: [bt, 8, GAZE_PAD]   f32
    img_ref : [bt, D_ROWS, IMG_LANES] f32
    fp_ref  : [FP_ROWS, FEAT_C]   bf16   VMEM scratch: 1-ring-padded feats
    """
    # zero the padded-feature scratch once; the interior (rows 11..90) is
    # fully overwritten for every batch item, the zero ring stays zero.
    fp_ref[...] = jnp.zeros_like(fp_ref)
    ones8 = jnp.ones((8, F_ROWS), jnp.bfloat16)

    for bi in range(bt):
        # ---- feature conv: 3x3 stride-2 conv == 2x2 conv on the s2d slab,
        #      computed as a single K=128 matmul over 4 lane-concatenated
        #      shifted views of the same VMEM block (implicit im2col).
        win = jnp.concatenate(
            [x_ref[bi, pl.ds(a * S2D_G + b, F_ROWS), :]
             for a in range(2) for b in range(2)], axis=-1)          # [80,128]
        acc = jnp.dot(win, fw_ref[...], preferred_element_type=jnp.float32)
        feat = jnp.maximum(acc + fb_ref[...], 0.0) * vm_ref[...]     # ReLU+mask
        feat_bf = feat.astype(jnp.bfloat16)

        # ---- gaze head: GAP as an ones-matmul on the MXU (junk rows are
        #      already zeroed by the mask; 1/64 folded into gw on the host),
        #      then the 32 -> 2 (padded to 128 lanes) FC.
        pooled = jnp.dot(ones8, feat_bf, preferred_element_type=jnp.float32)
        gaze = jnp.dot(pooled.astype(jnp.bfloat16), gw_ref[...],
                       preferred_element_type=jnp.float32)
        gaze_ref[bi] = gaze + gb_ref[...]

        # ---- decoder: place feats (already border-masked) into the 1-ring
        #      zero-padded scratch (row stride FPW), then run the fused
        #      2x nearest-upsample + 3x3 conv + sigmoid as ONE K=288 matmul
        #      producing all 4 parity phases packed into the 128 output lanes.
        fp_ref[pl.ds(FPW + 1, F_ROWS), :] = feat_bf
        dwin = jnp.concatenate(
            [fp_ref[pl.ds(dh * FPW + dw, D_ROWS), :]
             for dh in range(3) for dw in range(3)], axis=-1)        # [80,288]
        dacc = jnp.dot(dwin, dw_ref[...], preferred_element_type=jnp.float32)
        img_ref[bi] = jax.nn.sigmoid(dacc + db_ref[...])             # [80,128]


# ----------------------------------------------------------------------------
# pallas_call wrapper
# ----------------------------------------------------------------------------
def _pick_bt(n):
    # Batch tile: amortize per-grid-step overhead with several images per step,
    # but keep >=2 grid steps when possible so v7x's two TensorCores are fed.
    for bt in (8, 4, 2):
        if n % bt == 0 and n // bt >= 2:
            return bt
    return 1


def _fused_forward(params, x_s2d):
    n = x_s2d.shape[0]
    bt = _pick_bt(n)
    return pl.pallas_call(
        functools.partial(fused_kernel, bt=bt),
        out_shape=(jax.ShapeDtypeStruct((n, 8, GAZE_PAD), jnp.float32),
                   jax.ShapeDtypeStruct((n, D_ROWS, IMG_LANES), jnp.float32)),
        grid=(n // bt,),
        in_specs=[
            pl.BlockSpec((bt, X_ROWS, S2D_C), lambda i: (i, 0, 0)),
            pl.BlockSpec((4 * S2D_C, FEAT_C), lambda i: (0, 0)),
            pl.BlockSpec((1, FEAT_C), lambda i: (0, 0)),
            pl.BlockSpec((F_ROWS, 1), lambda i: (0, 0)),
            pl.BlockSpec((FEAT_C, GAZE_PAD), lambda i: (0, 0)),
            pl.BlockSpec((1, GAZE_PAD), lambda i: (0, 0)),
            pl.BlockSpec((9 * FEAT_C, IMG_LANES), lambda i: (0, 0)),
            pl.BlockSpec((1, IMG_LANES), lambda i: (0, 0)),
        ],
        out_specs=(
            pl.BlockSpec((bt, 8, GAZE_PAD), lambda i: (i, 0, 0)),
            pl.BlockSpec((bt, D_ROWS, IMG_LANES), lambda i: (i, 0, 0)),
        ),
        scratch_shapes=[pltpu.VMEM((FP_ROWS, FEAT_C), jnp.bfloat16)],
        compiler_params=pltpu.CompilerParams(
            dimension_semantics=("parallel",)),
    )(x_s2d, params["feat_w"], params["feat_b"], params["valid_mask"],
      params["gaze_w"], params["gaze_b"], params["dec_w"], params["dec_b"])


# ----------------------------------------------------------------------------
# Weight / mask builders (host-side, one-time)
# ----------------------------------------------------------------------------
def build_feat_weights(w):
    """[3,3,CIN,FEAT_C] stride-2 weights -> [4*S2D_C=128, FEAT_C] K-combined
    2x2 taps on the s2d slab (dh = 2a+pr, dw = 2b+pc, ch = pr*16+pc*8+c,
    K index = (a*2+b)*32 + ch)."""
    cout = w.shape[-1]
    wp = jnp.zeros((4, 4, CIN_PAD, cout), jnp.float32)
    wp = wp.at[:3, :3, :CIN, :].set(w)
    wp = wp.reshape(2, 2, 2, 2, CIN_PAD, cout)        # (a, pr, b, pc, c, co)
    wp = wp.transpose(0, 2, 1, 3, 4, 5)               # (a, b, pr, pc, c, co)
    return wp.reshape(4 * S2D_C, cout).astype(jnp.bfloat16)


def build_dec_weights(w):
    """[3,3,FEAT_C,COUT] -> [9*FEAT_C=288, IMG_LANES=128] combined weights for
    the fused upsample+conv over all 4 parity phases: K index = shift block
    (dh'*3+dw')*32 + c, lane = phase*32 + co, where W_eff[py,px,u,v] groups
    the 3 kernel rows/cols onto 2 padded-feature rows/cols."""
    groups = (((0,), (1, 2)), ((0, 1), (2,)))
    w = np.asarray(w, np.float32)
    big = np.zeros((3, 3, FEAT_C, 4, PHASE_C), np.float32)
    for py in range(2):
        for px in range(2):
            for u in range(2):
                for v in range(2):
                    acc = np.zeros((FEAT_C, COUT), np.float32)
                    for dh in groups[py][u]:
                        for dw in groups[px][v]:
                            acc += w[dh, dw]
                    big[py + u, px + v, :, py * 2 + px, :COUT] = acc
    return jnp.asarray(big.reshape(9 * FEAT_C, IMG_LANES)).astype(jnp.bfloat16)


def build_valid_mask():
    """[F_ROWS, 1] mask: 1.0 at valid feature rows r = ho*S2D_G + wo (wo < WO),
    0 at junk columns/rows (also zeroes the to-be-pad-ring decoder entries)."""
    m = np.zeros((F_ROWS, 1), np.float32)
    for ho in range(HO):
        m[ho * S2D_G: ho * S2D_G + WO, 0] = 1.0
    return jnp.asarray(m)


def init_params(key):
    k1, k2, k3 = jax.random.split(key, 3)
    feat_w = 0.05 * jax.random.normal(k1, (3, 3, CIN, FEAT_C), jnp.float32)
    gaze_w = 0.05 * jax.random.normal(k2, (FEAT_C, GAZE_DIM), jnp.float32)
    dec_w = 0.05 * jax.random.normal(k3, (3, 3, FEAT_C, COUT), jnp.float32)
    gw = jnp.zeros((FEAT_C, GAZE_PAD), jnp.float32)
    gw = gw.at[:, :GAZE_DIM].set(gaze_w / float(HO * WO))   # fold 1/64 GAP scale
    return {
        "feat_w": build_feat_weights(feat_w),                 # [128, 32] bf16
        "feat_b": jnp.zeros((1, FEAT_C), jnp.float32),
        "valid_mask": build_valid_mask(),                     # [80, 1]  f32
        "gaze_w": gw.astype(jnp.bfloat16),                    # [32, 128] bf16
        "gaze_b": jnp.zeros((1, GAZE_PAD), jnp.float32),
        "dec_w": build_dec_weights(dec_w),                    # [288, 128] bf16
        "dec_b": jnp.zeros((1, IMG_LANES), jnp.float32),
    }


# ----------------------------------------------------------------------------
# Model forward (wrapper does only minimal single-pass layout glue)
# ----------------------------------------------------------------------------
def _model_forward(params, face_nchw, require_img=True):
    n = face_nchw.shape[0]
    # one pad folds: conv 1-pixel pad, channel pad 3->8, and the junk row/col
    # of the s2d grid (spatial 16 -> 20); then one space-to-depth rearrangement.
    x = jnp.pad(face_nchw.astype(jnp.float32),
                ((0, 0), (0, CIN_PAD - CIN), (1, 3), (1, 3)))      # [N,8,20,20]
    x = x.reshape(n, CIN_PAD, S2D_G, 2, S2D_G, 2)
    x = x.transpose(0, 2, 4, 3, 5, 1)                              # (n,hs,ws,pr,pc,c)
    x = x.reshape(n, X_ROWS, S2D_C).astype(jnp.bfloat16)           # [N,100,32]

    gaze_pad, img_pad = _fused_forward(params, x)
    gaze = gaze_pad[:, 0, :GAZE_DIM]                               # [N, 2]

    img = None
    if require_img:
        # depth-to-space of the 4 parity phases packed in the lane dimension
        o = img_pad.reshape(n, HO, FPW, 4, PHASE_C)[:, :, :WO, :, :COUT]
        o = o.reshape(n, HO, WO, 2, 2, COUT)                       # (n,i,j,py,px,c)
        img = o.transpose(0, 5, 1, 3, 2, 4).reshape(n, COUT, 2 * HO, 2 * WO)
    return gaze, img


model_forward = jax.jit(_model_forward, static_argnames="require_img")


if __name__ == "__main__":
    key = jax.random.PRNGKey(0)
    pkey, xkey = jax.random.split(key)
    params = init_params(pkey)

    # face input: NCHW, small shape consistent with an image backbone
    face = jax.random.normal(xkey, (2, CIN, H, W), jnp.float32)

    gaze, img = model_forward(params, face, require_img=True)
    gaze = jax.block_until_ready(gaze)
    img = jax.block_until_ready(img)

    assert gaze.shape == (2, GAZE_DIM)
    assert img.shape == (2, COUT, H, W)
    assert bool(jnp.all(jnp.isfinite(gaze)))
    assert bool(jnp.all((img >= 0.0) & (img <= 1.0)))
    print("KERNEL_OK")
</pallas_src>

<mosaic_0001>
module attributes {stable_mosaic.version = 11 : i64} {
  func.func @fused_kernel(%arg0: i32, %arg1: memref<1x100x32xbf16, #tpu.memory_space<vmem>>, %arg2: memref<128x32xbf16, #tpu.memory_space<vmem>>, %arg3: memref<1x32xf32, #tpu.memory_space<vmem>>, %arg4: memref<80x1xf32, #tpu.memory_space<vmem>>, %arg5: memref<32x128xbf16, #tpu.memory_space<vmem>>, %arg6: memref<1x128xf32, #tpu.memory_space<vmem>>, %arg7: memref<288x128xbf16, #tpu.memory_space<vmem>>, %arg8: memref<1x128xf32, #tpu.memory_space<vmem>>, %arg9: memref<1x8x128xf32, #tpu.memory_space<vmem>>, %arg10: memref<1x80x128xf32, #tpu.memory_space<vmem>>, %arg11: memref<104x32xbf16, #tpu.memory_space<vmem>>) attributes {dimension_semantics = [#tpu.dimension_semantics<parallel>], iteration_bounds = array<i64: 2>, scalar_prefetch = 0 : i64, scratch_operands = 1 : i64, tpu.core_type = #tpu.core_type<tc>, window_params = [{transform_indices = @transform_0, window_bounds = array<i64: 1, 100, 32>}, {pipeline_mode = #tpu.pipeline_mode<synchronous>, transform_indices = @transform_1, window_bounds = array<i64: 128, 32>}, {pipeline_mode = #tpu.pipeline_mode<synchronous>, transform_indices = @transform_2, window_bounds = array<i64: 1, 32>}, {pipeline_mode = #tpu.pipeline_mode<synchronous>, transform_indices = @transform_3, window_bounds = array<i64: 80, 1>}, {pipeline_mode = #tpu.pipeline_mode<synchronous>, transform_indices = @transform_4, window_bounds = array<i64: 32, 128>}, {pipeline_mode = #tpu.pipeline_mode<synchronous>, transform_indices = @transform_5, window_bounds = array<i64: 1, 128>}, {pipeline_mode = #tpu.pipeline_mode<synchronous>, transform_indices = @transform_6, window_bounds = array<i64: 288, 128>}, {pipeline_mode = #tpu.pipeline_mode<synchronous>, transform_indices = @transform_7, window_bounds = array<i64: 1, 128>}, {transform_indices = @transform_8, window_bounds = array<i64: 1, 8, 128>}, {transform_indices = @transform_9, window_bounds = array<i64: 1, 80, 128>}]} {
    %cst = arith.constant 0.000000e+00 : bf16
    %0 = vector.broadcast %cst : bf16 to vector<104x32xbf16>
    %c0 = arith.constant 0 : index
    %c0_0 = arith.constant 0 : index
    %1 = vector.load %arg11[%c0, %c0_0] : memref<104x32xbf16, #tpu.memory_space<vmem>>, vector<104x32xbf16>
    tpu.vector_store %arg11[%c0, %c0_0], %0 {strides = array<i32>} : memref<104x32xbf16, #tpu.memory_space<vmem>>, vector<104x32xbf16>,
    %cst_1 = arith.constant 1.000000e+00 : bf16
    %2 = vector.broadcast %cst_1 : bf16 to vector<8x80xbf16>
    %c0_2 = arith.constant 0 : index
    %c0_3 = arith.constant 0 : index
    %c0_4 = arith.constant 0 : index
    %3 = vector.load %arg1[%c0_2, %c0_3, %c0_4] : memref<1x100x32xbf16, #tpu.memory_space<vmem>>, vector<1x80x32xbf16>
    %4 = vector.shape_cast %3 : vector<1x80x32xbf16> to vector<80x32xbf16>
    %c0_5 = arith.constant 0 : index
    %c1 = arith.constant 1 : index
    %c0_6 = arith.constant 0 : index
    %5 = vector.load %arg1[%c0_5, %c1, %c0_6] : memref<1x100x32xbf16, #tpu.memory_space<vmem>>, vector<1x80x32xbf16>
    %6 = vector.shape_cast %5 : vector<1x80x32xbf16> to vector<80x32xbf16>
    %c0_7 = arith.constant 0 : index
    %c10 = arith.constant 10 : index
    %c0_8 = arith.constant 0 : index
    %7 = vector.load %arg1[%c0_7, %c10, %c0_8] : memref<1x100x32xbf16, #tpu.memory_space<vmem>>, vector<1x80x32xbf16>
    %8 = vector.shape_cast %7 : vector<1x80x32xbf16> to vector<80x32xbf16>
    %c0_9 = arith.constant 0 : index
    %c11 = arith.constant 11 : index
    %c0_10 = arith.constant 0 : index
    %9 = vector.load %arg1[%c0_9, %c11, %c0_10] : memref<1x100x32xbf16, #tpu.memory_space<vmem>>, vector<1x80x32xbf16>
    %10 = vector.shape_cast %9 : vector<1x80x32xbf16> to vector<80x32xbf16>
    %11 = tpu.concatenate %4, %6, %8, %10 in 1 : vector<80x32xbf16>, vector<80x32xbf16>, vector<80x32xbf16>, vector<80x32xbf16> -> vector<80x128xbf16>
    %c0_11 = arith.constant 0 : index
    %c0_12 = arith.constant 0 : index
    %12 = vector.load %arg2[%c0_11, %c0_12] : memref<128x32xbf16, #tpu.memory_space<vmem>>, vector<128x32xbf16>
    %cst_13 = arith.constant dense<0.000000e+00> : vector<80x32xf32>
    %13 = tpu.matmul %11, %12, %cst_13 {dimension_numbers = #tpu.dot_dimension_numbers<[1], [0], [0], [1], [0, 0, 1, 1], [], []>} : vector<80x128xbf16>, vector<128x32xbf16>, vector<80x32xf32> -> vector<80x32xf32>
    %c0_14 = arith.constant 0 : index
    %c0_15 = arith.constant 0 : index
    %14 = vector.load %arg3[%c0_14, %c0_15] : memref<1x32xf32, #tpu.memory_space<vmem>>, vector<1x32xf32>
    %15 = vector.broadcast %14 : vector<1x32xf32> to vector<80x32xf32>
    %16 = arith.addf %13, %15 : vector<80x32xf32>
    %cst_16 = arith.constant 0.000000e+00 : f32
    %17 = vector.broadcast %cst_16 : f32 to vector<80x32xf32>
    %18 = arith.maximumf %16, %17 : vector<80x32xf32>
    %c0_17 = arith.constant 0 : index
    %c0_18 = arith.constant 0 : index
    %19 = vector.load %arg4[%c0_17, %c0_18] : memref<80x1xf32, #tpu.memory_space<vmem>>, vector<80x1xf32>
    %20 = vector.broadcast %19 : vector<80x1xf32> to vector<80x32xf32>
    %21 = arith.mulf %18, %20 : vector<80x32xf32>
    %22 = arith.truncf %21 : vector<80x32xf32> to vector<80x32xbf16>
    %cst_19 = arith.constant dense<0.000000e+00> : vector<8x32xf32>
    %23 = tpu.matmul %2, %22, %cst_19 {dimension_numbers = #tpu.dot_dimension_numbers<[1], [0], [0], [1], [0, 0, 1, 1], [], []>} : vector<8x80xbf16>, vector<80x32xbf16>, vector<8x32xf32> -> vector<8x32xf32>
    %24 = arith.truncf %23 : vector<8x32xf32> to vector<8x32xbf16>
    %c0_20 = arith.constant 0 : index
    %c0_21 = arith.constant 0 : index
    %25 = vector.load %arg5[%c0_20, %c0_21] : memref<32x128xbf16, #tpu.memory_space<vmem>>, vector<32x128xbf16>
    %cst_22 = arith.constant dense<0.000000e+00> : vector<8x128xf32>
    %26 = tpu.matmul %24, %25, %cst_22 {dimension_numbers = #tpu.dot_dimension_numbers<[1], [0], [0], [1], [0, 0, 1, 1], [], []>} : vector<8x32xbf16>, vector<32x128xbf16>, vector<8x128xf32> -> vector<8x128xf32>
    %c0_23 = arith.constant 0 : index
    %c0_24 = arith.constant 0 : index
    %27 = vector.load %arg6[%c0_23, %c0_24] : memref<1x128xf32, #tpu.memory_space<vmem>>, vector<1x128xf32>
    %28 = vector.broadcast %27 : vector<1x128xf32> to vector<8x128xf32>
    %29 = arith.addf %26, %28 : vector<8x128xf32>
    %c0_25 = arith.constant 0 : index
    %c0_26 = arith.constant 0 : index
    %c0_27 = arith.constant 0 : index
    %30 = vector.load %arg9[%c0_25, %c0_26, %c0_27] : memref<1x8x128xf32, #tpu.memory_space<vmem>>, vector<1x8x128xf32>
    %31 = vector.shape_cast %30 : vector<1x8x128xf32> to vector<8x128xf32>
    %32 = vector.shape_cast %29 : vector<8x128xf32> to vector<1x8x128xf32>
    tpu.vector_store %arg9[%c0_25, %c0_26, %c0_27], %32 {strides = array<i32>} : memref<1x8x128xf32, #tpu.memory_space<vmem>>, vector<1x8x128xf32>,
    %c11_28 = arith.constant 11 : index
    %c0_29 = arith.constant 0 : index
    %33 = vector.load %arg11[%c11_28, %c0_29] : memref<104x32xbf16, #tpu.memory_space<vmem>>, vector<80x32xbf16>
    tpu.vector_store %arg11[%c11_28, %c0_29], %22 {strides = array<i32>} : memref<104x32xbf16, #tpu.memory_space<vmem>>, vector<80x32xbf16>,
    %c0_30 = arith.constant 0 : index
    %c0_31 = arith.constant 0 : index
    %34 = vector.load %arg11[%c0_30, %c0_31] : memref<104x32xbf16, #tpu.memory_space<vmem>>, vector<80x32xbf16>
    %c1_32 = arith.constant 1 : index
    %c0_33 = arith.constant 0 : index
    %35 = vector.load %arg11[%c1_32, %c0_33] : memref<104x32xbf16, #tpu.memory_space<vmem>>, vector<80x32xbf16>
    %c2 = arith.constant 2 : index
    %c0_34 = arith.constant 0 : index
    %36 = vector.load %arg11[%c2, %c0_34] : memref<104x32xbf16, #tpu.memory_space<vmem>>, vector<80x32xbf16>
    %c10_35 = arith.constant 10 : index
    %c0_36 = arith.constant 0 : index
    %37 = vector.load %arg11[%c10_35, %c0_36] : memref<104x32xbf16, #tpu.memory_space<vmem>>, vector<80x32xbf16>
    %c11_37 = arith.constant 11 : index
    %c0_38 = arith.constant 0 : index
    %38 = vector.load %arg11[%c11_37, %c0_38] : memref<104x32xbf16, #tpu.memory_space<vmem>>, vector<80x32xbf16>
    %c12 = arith.constant 12 : index
    %c0_39 = arith.constant 0 : index
    %39 = vector.load %arg11[%c12, %c0_39] : memref<104x32xbf16, #tpu.memory_space<vmem>>, vector<80x32xbf16>
    %c20 = arith.constant 20 : index
    %c0_40 = arith.constant 0 : index
    %40 = vector.load %arg11[%c20, %c0_40] : memref<104x32xbf16, #tpu.memory_space<vmem>>, vector<80x32xbf16>
    %c21 = arith.constant 21 : index
    %c0_41 = arith.constant 0 : index
    %41 = vector.load %arg11[%c21, %c0_41] : memref<104x32xbf16, #tpu.memory_space<vmem>>, vector<80x32xbf16>
    %c22 = arith.constant 22 : index
    %c0_42 = arith.constant 0 : index
    %42 = vector.load %arg11[%c22, %c0_42] : memref<104x32xbf16, #tpu.memory_space<vmem>>, vector<80x32xbf16>
    %43 = tpu.concatenate %34, %35, %36, %37, %38, %39, %40, %41, %42 in 1 : vector<80x32xbf16>, vector<80x32xbf16>, vector<80x32xbf16>, vector<80x32xbf16>, vector<80x32xbf16>, vector<80x32xbf16>, vector<80x32xbf16>, vector<80x32xbf16>, vector<80x32xbf16> -> vector<80x288xbf16>
    %c0_43 = arith.constant 0 : index
    %c0_44 = arith.constant 0 : index
    %44 = vector.load %arg7[%c0_43, %c0_44] : memref<288x128xbf16, #tpu.memory_space<vmem>>, vector<288x128xbf16>
    %cst_45 = arith.constant dense<0.000000e+00> : vector<80x128xf32>
    %45 = tpu.matmul %43, %44, %cst_45 {dimension_numbers = #tpu.dot_dimension_numbers<[1], [0], [0], [1], [0, 0, 1, 1], [], []>} : vector<80x288xbf16>, vector<288x128xbf16>, vector<80x128xf32> -> vector<80x128xf32>
    %c0_46 = arith.constant 0 : index
    %c0_47 = arith.constant 0 : index
    %46 = vector.load %arg8[%c0_46, %c0_47] : memref<1x128xf32, #tpu.memory_space<vmem>>, vector<1x128xf32>
    %47 = vector.broadcast %46 : vector<1x128xf32> to vector<80x128xf32>
    %48 = arith.addf %45, %47 : vector<80x128xf32>
    %49 = arith.negf %48 : vector<80x128xf32>
    %50 = math.exp %49 : vector<80x128xf32>
    %cst_48 = arith.constant 1.000000e+00 : f32
    %51 = vector.broadcast %cst_48 : f32 to vector<80x128xf32>
    %52 = arith.addf %51, %50 : vector<80x128xf32>
    %53 = arith.divf %51, %52 : vector<80x128xf32>
    %c0_49 = arith.constant 0 : index
    %c0_50 = arith.constant 0 : index
    %c0_51 = arith.constant 0 : index
    %54 = vector.load %arg10[%c0_49, %c0_50, %c0_51] : memref<1x80x128xf32, #tpu.memory_space<vmem>>, vector<1x80x128xf32>
    %55 = vector.shape_cast %54 : vector<1x80x128xf32> to vector<80x128xf32>
    %56 = vector.shape_cast %53 : vector<80x128xf32> to vector<1x80x128xf32>
    tpu.vector_store %arg10[%c0_49, %c0_50, %c0_51], %56 {strides = array<i32>} : memref<1x80x128xf32, #tpu.memory_space<vmem>>, vector<1x80x128xf32>,
    return
  }
  func.func @transform_0(%arg0: i32) -> (i32, i32, i32) {
    %c0_i32 = arith.constant 0 : i32
    %c0_i32_0 = arith.constant 0 : i32
    %c0_i32_1 = arith.constant 0 : i32
    return %arg0, %c0_i32, %c0_i32_0 : i32, i32, i32
  }
  func.func @transform_1(%arg0: i32) -> (i32, i32) {
    %c0_i32 = arith.constant 0 : i32
    %c0_i32_0 = arith.constant 0 : i32
    %c0_i32_1 = arith.constant 0 : i32
    return %c0_i32, %c0_i32_0 : i32, i32
  }
  func.func @transform_2(%arg0: i32) -> (i32, i32) {
    %c0_i32 = arith.constant 0 : i32
    %c0_i32_0 = arith.constant 0 : i32
    %c0_i32_1 = arith.constant 0 : i32
    return %c0_i32, %c0_i32_0 : i32, i32
  }
  func.func @transform_3(%arg0: i32) -> (i32, i32) {
    %c0_i32 = arith.constant 0 : i32
    %c0_i32_0 = arith.constant 0 : i32
    %c0_i32_1 = arith.constant 0 : i32
    return %c0_i32, %c0_i32_0 : i32, i32
  }
  func.func @transform_4(%arg0: i32) -> (i32, i32) {
    %c0_i32 = arith.constant 0 : i32
    %c0_i32_0 = arith.constant 0 : i32
    %c0_i32_1 = arith.constant 0 : i32
    return %c0_i32, %c0_i32_0 : i32, i32
  }
  func.func @transform_5(%arg0: i32) -> (i32, i32) {
    %c0_i32 = arith.constant 0 : i32
    %c0_i32_0 = arith.constant 0 : i32
    %c0_i32_1 = arith.constant 0 : i32
    return %c0_i32, %c0_i32_0 : i32, i32
  }
  func.func @transform_6(%arg0: i32) -> (i32, i32) {
    %c0_i32 = arith.constant 0 : i32
    %c0_i32_0 = arith.constant 0 : i32
    %c0_i32_1 = arith.constant 0 : i32
    return %c0_i32, %c0_i32_0 : i32, i32
  }
  func.func @transform_7(%arg0: i32) -> (i32, i32) {
    %c0_i32 = arith.constant 0 : i32
    %c0_i32_0 = arith.constant 0 : i32
    %c0_i32_1 = arith.constant 0 : i32
    return %c0_i32, %c0_i32_0 : i32, i32
  }
  func.func @transform_8(%arg0: i32) -> (i32, i32, i32) {
    %c0_i32 = arith.constant 0 : i32
    %c0_i32_0 = arith.constant 0 : i32
    %c0_i32_1 = arith.constant 0 : i32
    return %arg0, %c0_i32, %c0_i32_0 : i32, i32, i32
  }
  func.func @transform_9(%arg0: i32) -> (i32, i32, i32) {
    %c0_i32 = arith.constant 0 : i32
    %c0_i32_0 = arith.constant 0 : i32
    %c0_i32_1 = arith.constant 0 : i32
    return %arg0, %c0_i32, %c0_i32_0 : i32, i32, i32
  }
}

</mosaic_0001>

<llo_original>
// kernel: _model_forward.1
$region0: #{_model_forward.1}
  #allocation0 [shape = 'u32[]', space=smem, size = 0x4, offset = 0x4, fixed_abs, tag = 'smem constant byte address 0x4 - core index']
  #allocation1 [shape = 'u32[144,128]{1,0:T(1,128)}', space=vmem, size = 0x12000, scoped, tag = 'internal scratch']
  #allocation2 [shape = 'bf16[104,32]{1,0:T(8,128)(2,1)}', space=vmem, size = 0x6800, scoped, tag = 'scratch operand']
  %s0 = inlined_call_operand.vmem [shape: bf16[2,100,32], index: 0, kind: input, shape index: {}]
  %s1 = inlined_call_operand.vmem [shape: bf16[128,32], index: 1, kind: input, shape index: {}]
  %s2 = inlined_call_operand.vmem [shape: f32[1,32], index: 2, kind: input, shape index: {}]
  %s3 = inlined_call_operand.vmem [shape: f32[80,1], index: 3, kind: input, shape index: {}]
  %s4 = inlined_call_operand.vmem [shape: bf16[32,128], index: 4, kind: input, shape index: {}]
  %s5 = inlined_call_operand.vmem [shape: f32[1,128], index: 5, kind: input, shape index: {}]
  %s6 = inlined_call_operand.vmem [shape: bf16[288,128], index: 6, kind: input, shape index: {}]
  %s7 = inlined_call_operand.vmem [shape: f32[1,128], index: 7, kind: input, shape index: {}]
  %s8 = inlined_call_operand.vmem [shape: f32[2,8,128], index: 8, kind: output, shape index: {0}]
  %s9 = inlined_call_operand.vmem [shape: f32[2,80,128], index: 9, kind: output, shape index: {1}]
  %10 = xla_tuple %s8, %s9
  %s11 = sld [smem:[#allocation0]]
  $region73: #{_model_forward.1} parent=0
    _
  %s13 = ssub.s32 1, %s11
  %s14 = scalar_select 0, %s13, %s11
  loop: start=0, step=1, limit=4
  $region2: #{_model_forward.1} parent=0 // loop_pre_header
    _
  $region3: #{_model_forward.1} parent=0 // loop_header
    %s16 = sphi 0, %s20
    %p17 = scmp.ge.s32.totalorder %s16, 4
    %s26 = sphi 0, %s28
    %s29 = sphi 0, %s26
    %s30 = sphi 0, %s29
    %s46 = sphi 0, %s30
    %s50 = sphi 0, %s50
    %s52 = sphi 0, %s50
    %s53 = sphi 0, %s52
    %s67 = sphi 0, %s53
    %s71 = sphi 0, %s71
    %s73 = sphi 0, %s71
    %s74 = sphi 0, %s73
    %s88 = sphi 0, %s74
    %s92 = sphi 0, %s92
    %s94 = sphi 0, %s92
    %s95 = sphi 0, %s94
    %s109 = sphi 0, %s95
    %s113 = sphi 0, %s113
    %s115 = sphi 0, %s113
    %s116 = sphi 0, %s115
    %s130 = sphi 0, %s116
    %s134 = sphi 0, %s134
    %s136 = sphi 0, %s134
    %s137 = sphi 0, %s136
    %s151 = sphi 0, %s137
    %s155 = sphi 0, %s155
    %s157 = sphi 0, %s155
    %s158 = sphi 0, %s157
    %s172 = sphi 0, %s158
    %s176 = sphi 0, %s176
    %s178 = sphi 0, %s176
    %s179 = sphi 0, %s178
    %s193 = sphi 0, %s179
    %s199 = sphi 0, %s201
    %s202 = sphi 0, %s199
    %s203 = sphi 0, %s202
    %s219 = sphi 0, %s203
    %s225 = sphi 0, %s227
    %s228 = sphi 0, %s225
    %s229 = sphi 0, %s228
    %s245 = sphi 0, %s229
  $region4: #{_model_forward.1} parent=0 // loop_header_branch
    %19 = sbr.rel (%p17) target = $region8
  $region5: #{_model_forward.1} parent=0 // loop_body
    %s21 = ssub.s32 %s16, 1
    %s22 = ssub.s32 %s16, 2
    %s23 = sadd.s32 %s16, 1
    %s24 = ssub.s32 %s16, %s23
    %p25 = scmp.eq.s32.totalorder %s24, 0
    %s27 = sadd.s32 %s26, 1
    %s28 = scalar_select %p25, %s26, %s27
    %p31 = pneg %p25
    %p32 = scmp.eq.s32.totalorder %s16, 1
    %p33 = por %p31, %p32
    %p34 = scmp.ne.s32.totalorder %s26, %s29
    %p35 = scmp.eq.s32.totalorder %s16, 0
    %p36 = por %p34, %p35
    %p37 = scmp.ne.s32.totalorder %s26, %s29
    %p38 = scmp.eq.s32.totalorder %s21, 1
    %p39 = por %p37, %p38
    %p40 = scmp.ne.s32.totalorder %s29, %s30
    %p41 = scmp.eq.s32.totalorder %s21, 0
    %p42 = por %p40, %p41
    %p43 = scmp.ne.s32.totalorder %s29, %s30
    %p44 = scmp.eq.s32.totalorder %s22, 1
    %p45 = por %p43, %p44
    %p47 = scmp.ne.s32.totalorder %s30, %s46
    %p48 = scmp.eq.s32.totalorder %s22, 0
    %p49 = por %p47, %p48
    %s51 = sadd.s32 %s50, 1
    %p54 = scmp.eq.s32.totalorder %s16, 1
    %p55 = scmp.ne.s32.totalorder %s50, %s52
    %p56 = scmp.eq.s32.totalorder %s16, 0
    %p57 = por %p55, %p56
    %p58 = scmp.ne.s32.totalorder %s50, %s52
    %p59 = scmp.eq.s32.totalorder %s21, 1
    %p60 = por %p58, %p59
    %p61 = scmp.ne.s32.totalorder %s52, %s53
    %p62 = scmp.eq.s32.totalorder %s21, 0
    %p63 = por %p61, %p62
    %p64 = scmp.ne.s32.totalorder %s52, %s53
    %p65 = scmp.eq.s32.totalorder %s22, 1
    %p66 = por %p64, %p65
    %p68 = scmp.ne.s32.totalorder %s53, %s67
    %p69 = scmp.eq.s32.totalorder %s22, 0
    %p70 = por %p68, %p69
    %s72 = sadd.s32 %s71, 1
    %p75 = scmp.eq.s32.totalorder %s16, 1
    %p76 = scmp.ne.s32.totalorder %s71, %s73
    %p77 = scmp.eq.s32.totalorder %s16, 0
    %p78 = por %p76, %p77
    %p79 = scmp.ne.s32.totalorder %s71, %s73
    %p80 = scmp.eq.s32.totalorder %s21, 1
    %p81 = por %p79, %p80
    %p82 = scmp.ne.s32.totalorder %s73, %s74
    %p83 = scmp.eq.s32.totalorder %s21, 0
    %p84 = por %p82, %p83
    %p85 = scmp.ne.s32.totalorder %s73, %s74
    %p86 = scmp.eq.s32.totalorder %s22, 1
    %p87 = por %p85, %p86
    %p89 = scmp.ne.s32.totalorder %s74, %s88
    %p90 = scmp.eq.s32.totalorder %s22, 0
    %p91 = por %p89, %p90
    %s93 = sadd.s32 %s92, 1
    %p96 = scmp.eq.s32.totalorder %s16, 1
    %p97 = scmp.ne.s32.totalorder %s92, %s94
    %p98 = scmp.eq.s32.totalorder %s16, 0
    %p99 = por %p97, %p98
    %p100 = scmp.ne.s32.totalorder %s92, %s94
    %p101 = scmp.eq.s32.totalorder %s21, 1
    %p102 = por %p100, %p101
    %p103 = scmp.ne.s32.totalorder %s94, %s95
    %p104 = scmp.eq.s32.totalorder %s21, 0
    %p105 = por %p103, %p104
    %p106 = scmp.ne.s32.totalorder %s94, %s95
    %p107 = scmp.eq.s32.totalorder %s22, 1
    %p108 = por %p106, %p107
    %p110 = scmp.ne.s32.totalorder %s95, %s109
    %p111 = scmp.eq.s32.totalorder %s22, 0
    %p112 = por %p110, %p111
    %s114 = sadd.s32 %s113, 1
    %p117 = scmp.eq.s32.totalorder %s16, 1
    %p118 = scmp.ne.s32.totalorder %s113, %s115
    %p119 = scmp.eq.s32.totalorder %s16, 0
    %p120 = por %p118, %p119
    %p121 = scmp.ne.s32.totalorder %s113, %s115
    %p122 = scmp.eq.s32.totalorder %s21, 1
    %p123 = por %p121, %p122
    %p124 = scmp.ne.s32.totalorder %s115, %s116
    %p125 = scmp.eq.s32.totalorder %s21, 0
    %p126 = por %p124, %p125
    %p127 = scmp.ne.s32.totalorder %s115, %s116
    %p128 = scmp.eq.s32.totalorder %s22, 1
    %p129 = por %p127, %p128
    %p131 = scmp.ne.s32.totalorder %s116, %s130
    %p132 = scmp.eq.s32.totalorder %s22, 0
    %p133 = por %p131, %p132
    %s135 = sadd.s32 %s134, 1
    %p138 = scmp.eq.s32.totalorder %s16, 1
    %p139 = scmp.ne.s32.totalorder %s134, %s136
    %p140 = scmp.eq.s32.totalorder %s16, 0
    %p141 = por %p139, %p140
    %p142 = scmp.ne.s32.totalorder %s134, %s136
    %p143 = scmp.eq.s32.totalorder %s21, 1
    %p144 = por %p142, %p143
    %p145 = scmp.ne.s32.totalorder %s136, %s137
    %p146 = scmp.eq.s32.totalorder %s21, 0
    %p147 = por %p145, %p146
    %p148 = scmp.ne.s32.totalorder %s136, %s137
    %p149 = scmp.eq.s32.totalorder %s22, 1
    %p150 = por %p148, %p149
    %p152 = scmp.ne.s32.totalorder %s137, %s151
    %p153 = scmp.eq.s32.totalorder %s22, 0
    %p154 = por %p152, %p153
    %s156 = sadd.s32 %s155, 1
    %p159 = scmp.eq.s32.totalorder %s16, 1
    %p160 = scmp.ne.s32.totalorder %s155, %s157
    %p161 = scmp.eq.s32.totalorder %s16, 0
    %p162 = por %p160, %p161
    %p163 = scmp.ne.s32.totalorder %s155, %s157
    %p164 = scmp.eq.s32.totalorder %s21, 1
    %p165 = por %p163, %p164
    %p166 = scmp.ne.s32.totalorder %s157, %s158
    %p167 = scmp.eq.s32.totalorder %s21, 0
    %p168 = por %p166, %p167
    %p169 = scmp.ne.s32.totalorder %s157, %s158
    %p170 = scmp.eq.s32.totalorder %s22, 1
    %p171 = por %p169, %p170
    %p173 = scmp.ne.s32.totalorder %s158, %s172
    %p174 = scmp.eq.s32.totalorder %s22, 0
    %p175 = por %p173, %p174
    %s177 = sadd.s32 %s176, 1
    %p180 = scmp.eq.s32.totalorder %s16, 1
    %p181 = scmp.ne.s32.totalorder %s176, %s178
    %p182 = scmp.eq.s32.totalorder %s16, 0
    %p183 = por %p181, %p182
    %p184 = scmp.ne.s32.totalorder %s176, %s178
    %p185 = scmp.eq.s32.totalorder %s21, 1
    %p186 = por %p184, %p185
    %p187 = scmp.ne.s32.totalorder %s178, %s179
    %p188 = scmp.eq.s32.totalorder %s21, 0
    %p189 = por %p187, %p188
    %p190 = scmp.ne.s32.totalorder %s178, %s179
    %p191 = scmp.eq.s32.totalorder %s22, 1
    %p192 = por %p190, %p191
    %p194 = scmp.ne.s32.totalorder %s179, %s193
    %p195 = scmp.eq.s32.totalorder %s22, 0
    %p196 = por %p194, %p195
    %s197 = ssub.s32 %s16, %s23
    %p198 = scmp.eq.s32.totalorder %s197, 0
    %s200 = sadd.s32 %s199, 1
    %s201 = scalar_select %p198, %s199, %s200
    %p204 = pneg %p198
    %p205 = scmp.eq.s32.totalorder %s16, 1
    %p206 = por %p204, %p205
    %p207 = scmp.ne.s32.totalorder %s199, %s202
    %p208 = scmp.eq.s32.totalorder %s16, 0
    %p209 = por %p207, %p208
    %p210 = scmp.ne.s32.totalorder %s199, %s202
    %p211 = scmp.eq.s32.totalorder %s21, 1
    %p212 = por %p210, %p211
    %p213 = scmp.ne.s32.totalorder %s202, %s203
    %p214 = scmp.eq.s32.totalorder %s21, 0
    %p215 = por %p213, %p214
    %p216 = scmp.ne.s32.totalorder %s202, %s203
    %p217 = scmp.eq.s32.totalorder %s22, 1
    %p218 = por %p216, %p217
    %p220 = scmp.ne.s32.totalorder %s203, %s219
    %p221 = scmp.eq.s32.totalorder %s22, 0
    %p222 = por %p220, %p221
    %s223 = ssub.s32 %s16, %s23
    %p224 = scmp.eq.s32.totalorder %s223, 0
    %s226 = sadd.s32 %s225, 1
    %s227 = scalar_select %p224, %s225, %s226
    %p230 = pneg %p224
    %p231 = scmp.eq.s32.totalorder %s16, 1
    %p232 = por %p230, %p231
    %p233 = scmp.ne.s32.totalorder %s225, %s228
    %p234 = scmp.eq.s32.totalorder %s16, 0
    %p235 = por %p233, %p234
    %p236 = scmp.ne.s32.totalorder %s225, %s228
    %p237 = scmp.eq.s32.totalorder %s21, 1
    %p238 = por %p236, %p237
    %p239 = scmp.ne.s32.totalorder %s228, %s229
    %p240 = scmp.eq.s32.totalorder %s21, 0
    %p241 = por %p239, %p240
    %p242 = scmp.ne.s32.totalorder %s228, %s229
    %p243 = scmp.eq.s32.totalorder %s22, 1
    %p244 = por %p242, %p243
    %p246 = scmp.ne.s32.totalorder %s229, %s245
    %p247 = scmp.eq.s32.totalorder %s22, 0
    %p248 = por %p246, %p247
    %p249 = scmp.le.s32.totalorder 1, %s16
    %p250 = scmp.lt.s32.totalorder %s16, 3
    %p251 = pnand %p249, %p250
    %p252 = pneg %p251
    // Predicated region
    $region9: #{_model_forward.1} parent=5 // pred_check
      _
    $region10: #{_model_forward.1} parent=5 // pred_check_branch
      %254 = sbr.rel (%p251) target = $region12
    $region11: #{_model_forward.1} parent=5 // pred_region
      %s255 = ssub.s32 %s16, 1
      // Predicated region
      $region13: #{_model_forward.1} parent=11 // pred_check
        %p256 = pneg %p63
      $region14: #{_model_forward.1} parent=11 // pred_check_branch
        %258 = sbr.rel (%p256) target = $region16
      $region15: #{_model_forward.1} parent=11 // pred_region
        _
      $region16: #{_model_forward.1} parent=11 // pred_fallthru
        _
      // Predicated region
      $region17: #{_model_forward.1} parent=11 // pred_check
        %p259 = pneg %p84
      $region18: #{_model_forward.1} parent=11 // pred_check_branch
        %261 = sbr.rel (%p259) target = $region20
      $region19: #{_model_forward.1} parent=11 // pred_region
        _
      $region20: #{_model_forward.1} parent=11 // pred_fallthru
        _
      // Predicated region
      $region21: #{_model_forward.1} parent=11 // pred_check
        %p262 = pneg %p105
      $region22: #{_model_forward.1} parent=11 // pred_check_branch
        %264 = sbr.rel (%p262) target = $region24
      $region23: #{_model_forward.1} parent=11 // pred_region
        _
      $region24: #{_model_forward.1} parent=11 // pred_fallthru
        _
      // Predicated region
      $region25: #{_model_forward.1} parent=11 // pred_check
        %p265 = pneg %p126
      $region26: #{_model_forward.1} parent=11 // pred_check_branch
        %267 = sbr.rel (%p265) target = $region28
      $region27: #{_model_forward.1} parent=11 // pred_region
        _
      $region28: #{_model_forward.1} parent=11 // pred_fallthru
        _
      // Predicated region
      $region29: #{_model_forward.1} parent=11 // pred_check
        %p268 = pneg %p147
      $region30: #{_model_forward.1} parent=11 // pred_check_branch
        %270 = sbr.rel (%p268) target = $region32
      $region31: #{_model_forward.1} parent=11 // pred_region
        _
      $region32: #{_model_forward.1} parent=11 // pred_fallthru
        _
      // Predicated region
      $region33: #{_model_forward.1} parent=11 // pred_check
        %p271 = pneg %p168
      $region34: #{_model_forward.1} parent=11 // pred_check_branch
        %273 = sbr.rel (%p271) target = $region36
      $region35: #{_model_forward.1} parent=11 // pred_region
        _
      $region36: #{_model_forward.1} parent=11 // pred_fallthru
        _
      // Predicated region
      $region37: #{_model_forward.1} parent=11 // pred_check
        %p274 = pneg %p189
      $region38: #{_model_forward.1} parent=11 // pred_check_branch
        %276 = sbr.rel (%p274) target = $region40
      $region39: #{_model_forward.1} parent=11 // pred_region
        _
      $region40: #{_model_forward.1} parent=11 // pred_fallthru
        _
    $region12: #{_model_forward.1} parent=5 // pred_fallthru
      _
    %p277 = scmp.lt.s32.totalorder %s16, 2
    // Predicated region
    $region41: #{_model_forward.1} parent=5 // pred_check
      %p278 = pneg %p277
    $region42: #{_model_forward.1} parent=5 // pred_check_branch
      %280 = sbr.rel (%p278) target = $region44
    $region43: #{_model_forward.1} parent=5 // pred_region
      // Predicated region
      $region45: #{_model_forward.1} parent=43 // pred_check
        %p281 = pneg %p36
      $region46: #{_model_forward.1} parent=43 // pred_check_branch
        %283 = sbr.rel (%p281) target = $region48
      $region47: #{_model_forward.1} parent=43 // pred_region
        %p284 = scmp.lt.s32.totalorder %s16, 1
        %s285 = scalar_select %p284, %s16, 1
        %s286 = smul.addr %s285, 13
        %s287 = smul.addr %s286, 4
        %s288 = scalar_lea.vmem %s0, %s287
      $region48: #{_model_forward.1} parent=43 // pred_fallthru
        _
    $region44: #{_model_forward.1} parent=5 // pred_fallthru
      _
    %p289 = scmp.le.s32.totalorder 1, %s16
    %p290 = scmp.lt.s32.totalorder %s16, 3
    %p291 = pnand %p289, %p290
    %p292 = pneg %p291
    // Predicated region
    $region49: #{_model_forward.1} parent=5 // pred_check
      _
    $region50: #{_model_forward.1} parent=5 // pred_check_branch
      %294 = sbr.rel (%p291) target = $region52
    $region51: #{_model_forward.1} parent=5 // pred_region
      %s295 = ssub.s32 %s16, 1
      %p296 = scmp.lt.s32.totalorder %s21, 1
      %s297 = scalar_select %p296, %s21, 1
      %s298 = smul.addr %s297, 13
      %s299 = smul.addr %s298, 4
      %s300 = scalar_lea.vmem %s0, %s299
      %p301 = pneg %p42
      %p302 = pneg %p39
      %p303 = pneg %p63
      %p304 = pneg %p60
      %p305 = pneg %p84
      %p306 = pneg %p81
      %p307 = pneg %p105
      %p308 = pneg %p102
      %p309 = pneg %p126
      %p310 = pneg %p123
      %p311 = pneg %p147
      %p312 = pneg %p144
      %p313 = pneg %p168
      %p314 = pneg %p165
      %p315 = pneg %p189
      %p316 = pneg %p186
      %p317 = pneg %p215
      %p318 = pneg %p212
      %p319 = scmp.lt.s32.totalorder %s21, 1
      %s320 = scalar_select %p319, %s21, 1
      %s321 = smul.addr %s320, 8
      %s322 = scalar_lea.vmem %s8, %s321
      %p323 = pneg %p241
      %p324 = pneg %p238
      %p325 = scmp.lt.s32.totalorder %s21, 1
      %s326 = scalar_select %p325, %s21, 1
      %s327 = smul.addr %s326, 10
      %s328 = smul.addr %s327, 8
      %s329 = scalar_lea.vmem %s9, %s328
      %p330 = scmp.lt.s32.totalorder %s21, 1
      %s331 = scalar_select %p330, %s21, 1
      %s332 = smul.addr %s331, 13
      %s333 = smul.addr %s332, 4
      %s334 = scalar_lea.vmem %s0, %s333
      %p335 = scmp.lt.s32.totalorder %s21, 1
      %s336 = scalar_select %p335, %s21, 1
      %s337 = smul.addr %s336, 8
      %s338 = scalar_lea.vmem %s8, %s337
      %p339 = scmp.lt.s32.totalorder %s21, 1
      %s340 = scalar_select %p339, %s21, 1
      %s341 = smul.addr %s340, 10
      %s342 = smul.addr %s341, 8
      %s343 = scalar_lea.vmem %s9, %s342
      %vm346 = vcmask 257024
      %347 = vst.msk [vmem:[#allocation2] sm:$0xf] %vm346, 0
      %348 = vst.msk [vmem:[#allocation2 + $0x4] sm:$0xf] %vm346, 0
      %349 = vst.msk [vmem:[#allocation2 + $0x8] sm:$0xf] %vm346, 0
      %350 = vst.msk [vmem:[#allocation2 + $0xc] sm:$0xf] %vm346, 0
      %351 = vst.msk [vmem:[#allocation2 + $0x10] sm:$0xf] %vm346, 0
      %352 = vst.msk [vmem:[#allocation2 + $0x14] sm:$0xf] %vm346, 0
      %353 = vst.msk [vmem:[#allocation2 + $0x18] sm:$0xf] %vm346, 0
      %354 = vst.msk [vmem:[#allocation2 + $0x1c] sm:$0xf] %vm346, 0
      %355 = vst.msk [vmem:[#allocation2 + $0x20] sm:$0xf] %vm346, 0
      %356 = vst.msk [vmem:[#allocation2 + $0x24] sm:$0xf] %vm346, 0
      %357 = vst.msk [vmem:[#allocation2 + $0x28] sm:$0xf] %vm346, 0
      %358 = vst.msk [vmem:[#allocation2 + $0x2c] sm:$0xf] %vm346, 0
      %359 = vst.msk [vmem:[#allocation2 + $0x30] sm:$0xf] %vm346, 0
      %v360 = vld [vmem:[%s334] sm:$0xf]
      %v361 = vld [vmem:[%s334 + $0x4] sm:$0xf]
      %v362 = vld [vmem:[%s334 + $0x8] sm:$0xf]
      %v363 = vld [vmem:[%s334 + $0xc] sm:$0xf]
      %v364 = vld [vmem:[%s334 + $0x10] sm:$0xf]
      %v365 = vld [vmem:[%s334 + $0x14] sm:$0xf]
      %v366 = vld [vmem:[%s334 + $0x18] sm:$0xf]
      %v367 = vld [vmem:[%s334 + $0x1c] sm:$0xf]
      %v368 = vld [vmem:[%s334 + $0x20] sm:$0xf]
      %v369 = vld [vmem:[%s334 + $0x24] sm:$0xf]
      %v370 = vld [vmem:[%s334 + $0x28] sm:$0x1]
      %v371 = vld [vmem:[%s334 + $0x4] sm:$0xe]
      %v372 = vld [vmem:[%s334 + $0x28] sm:$0xf]
      %v373 = vld [vmem:[%s334 + $0x2c] sm:$0x1]
      %v374 = vld [vmem:[%s334 + $0x2c] sm:$0x3]
      %v385 = vunpack.c.l.b16 %v360
      %v386 = vunpack.c.l.b16 %v361
      %v387 = vunpack.c.l.b16 %v362
      %v388 = vunpack.c.l.b16 %v363
      %v389 = vunpack.c.l.b16 %v364
      %v390 = vunpack.c.l.b16 %v365
      %v391 = vunpack.c.l.b16 %v366
      %v392 = vunpack.c.l.b16 %v367
      %v393 = vunpack.c.l.b16 %v368
      %v394 = vunpack.c.l.b16 %v369
      %v395 = vpack.c.b16 %v386, %v385
      %v396 = vpack.c.b16 %v388, %v387
      %v397 = vpack.c.b16 %v390, %v389
      %v398 = vpack.c.b16 %v392, %v391
      %v399 = vpack.c.b16 %v394, %v393
      %v401 = vunpack.c.l.b16 %v370
      %v402 = vpack.c.b16 %v401, %v401
      %vm403 = vsmask.f32 7424
      %v405 = vshrl.u32 %v395, 16
      %v407 = vshll.u32 %v395, 16
      %v409 = vrot.slane %v407, 1
      %v410 = vor.u32 %v405, %v409
      %v412 = vshll.u32 %v396, 16
      %v414 = vrot.slane %v412, 1
      %v415 = vsel %vm403, %v410, %v414
      %v416 = vshrl.u32 %v396, 16
      %v418 = vor.u32 %v416, %v414
      %v420 = vshll.u32 %v397, 16
      %v422 = vrot.slane %v420, 1
      %v423 = vsel %vm403, %v418, %v422
      %v424 = vshrl.u32 %v397, 16
      %v426 = vor.u32 %v424, %v422
      %v428 = vshll.u32 %v398, 16
      %v430 = vrot.slane %v428, 1
      %v431 = vsel %vm403, %v426, %v430
      %v432 = vshrl.u32 %v398, 16
      %v434 = vor.u32 %v432, %v430
      %v436 = vshll.u32 %v399, 16
      %v438 = vrot.slane %v436, 1
      %v439 = vsel %vm403, %v434, %v438
      %v440 = vshrl.u32 %v399, 16
      %v442 = vor.u32 %v440, %v438
      %v444 = vshll.u32 %v402, 16
      %v446 = vrot.slane %v444, 1
      %v447 = vsel %vm403, %v442, %v446
      %448 = vrot.lane.b32.xlu0 %v415, 32
      %v449 = vpop.permute.xlu0 %448
      %450 = vrot.lane.b32.xlu0 %v423, 32
      %v451 = vpop.permute.xlu0 %450
      %452 = vrot.lane.b32.xlu0 %v431, 32
      %v453 = vpop.permute.xlu0 %452
      %454 = vrot.lane.b32.xlu0 %v439, 32
      %v455 = vpop.permute.xlu0 %454
      %456 = vrot.lane.b32.xlu0 %v447, 32
      %v457 = vpop.permute.xlu0 %456
      %v461 = vunpack.c.l.b16 %v371
      %v462 = vunpack.c.l.b16 %v372
      %v463 = vunpack.c.l.b16 %v373
      %v464 = vpack.c.b16 %v387, %v461
      %v465 = vpack.c.b16 %v389, %v388
      %v466 = vpack.c.b16 %v391, %v390
      %v467 = vpack.c.b16 %v393, %v392
      %v468 = vpack.c.b16 %v462, %v394
      %v469 = vpack.c.b16 %v463, %v463
      %vm470 = vcmask 1046528
      %v471 = vrot.slane %v464, 1
      %v472 = vrot.slane %v465, 1
      %v473 = vsel %vm470, %v471, %v472
      %v474 = vrot.slane %v466, 1
      %v475 = vsel %vm470, %v472, %v474
      %v476 = vrot.slane %v467, 1
      %v477 = vsel %vm470, %v474, %v476
      %v478 = vrot.slane %v468, 1
      %v479 = vsel %vm470, %v476, %v478
      %v480 = vrot.slane %v469, 1
      %v481 = vsel %vm470, %v478, %v480
      %482 = vrot.lane.b32.xlu0 %v473, 64
      %v483 = vpop.permute.xlu0 %482
      %484 = vrot.lane.b32.xlu0 %v475, 64
      %v485 = vpop.permute.xlu0 %484
      %486 = vrot.lane.b32.xlu0 %v477, 64
      %v487 = vpop.permute.xlu0 %486
      %488 = vrot.lane.b32.xlu0 %v479, 64
      %v489 = vpop.permute.xlu0 %488
      %490 = vrot.lane.b32.xlu0 %v481, 64
      %v491 = vpop.permute.xlu0 %490
      %v493 = vunpack.c.l.b16 %v374
      %v494 = vpack.c.b16 %v493, %v493
      %vm495 = vsmask.f32 6400
      %v497 = vshrl.u32 %v464, 16
      %v499 = vrot.slane %v497, 1
      %v500 = vshll.u32 %v464, 16
      %v502 = vrot.slane %v500, 2
      %v503 = vor.u32 %v499, %v502
      %v505 = vshrl.u32 %v465, 16
      %v507 = vrot.slane %v505, 1
      %v508 = vshll.u32 %v465, 16
      %v510 = vrot.slane %v508, 2
      %v511 = vor.u32 %v507, %v510
      %v512 = vsel %vm495, %v503, %v511
      %v514 = vshrl.u32 %v466, 16
      %v516 = vrot.slane %v514, 1
      %v517 = vshll.u32 %v466, 16
      %v519 = vrot.slane %v517, 2
      %v520 = vor.u32 %v516, %v519
      %v521 = vsel %vm495, %v511, %v520
      %v523 = vshrl.u32 %v467, 16
      %v525 = vrot.slane %v523, 1
      %v526 = vshll.u32 %v467, 16
      %v528 = vrot.slane %v526, 2
      %v529 = vor.u32 %v525, %v528
      %v530 = vsel %vm495, %v520, %v529
      %v532 = vshrl.u32 %v468, 16
      %v534 = vrot.slane %v532, 1
      %v535 = vshll.u32 %v468, 16
      %v537 = vrot.slane %v535, 2
      %v538 = vor.u32 %v534, %v537
      %v539 = vsel %vm495, %v529, %v538
      %v541 = vshrl.u32 %v494, 16
      %v543 = vrot.slane %v541, 1
      %v544 = vshll.u32 %v494, 16
      %v546 = vrot.slane %v544, 2
      %v547 = vor.u32 %v543, %v546
      %v548 = vsel %vm495, %v538, %v547
      %549 = vrot.lane.b32.xlu0 %v512, 96
      %v550 = vpop.permute.xlu0 %549
      %551 = vrot.lane.b32.xlu0 %v521, 96
      %v552 = vpop.permute.xlu0 %551
      %553 = vrot.lane.b32.xlu0 %v530, 96
      %v554 = vpop.permute.xlu0 %553
      %555 = vrot.lane.b32.xlu0 %v539, 96
      %v556 = vpop.permute.xlu0 %555
      %557 = vrot.lane.b32.xlu0 %v548, 96
      %v558 = vpop.permute.xlu0 %557
      %vm559 = vcmask 261120
      %v561 = vsel %vm559, %v395, %v449
      %v563 = vsel %vm559, %v396, %v451
      %v565 = vsel %vm559, %v397, %v453
      %v567 = vsel %vm559, %v398, %v455
      %v569 = vsel %vm559, %v399, %v457
      %vm570 = vcmask 523264
      %v572 = vsel %vm570, %v561, %v483
      %v574 = vsel %vm570, %v563, %v485
      %v576 = vsel %vm570, %v565, %v487
      %v578 = vsel %vm570, %v567, %v489
      %v580 = vsel %vm570, %v569, %v491
      %vm581 = vcmask 785408
      %v583 = vsel %vm581, %v572, %v550
      %v586 = vsel %vm581, %v574, %v552
      %v589 = vsel %vm581, %v576, %v554
      %v592 = vsel %vm581, %v578, %v556
      %v595 = vsel %vm581, %v580, %v558
      %v597 = vld [vmem:[%s1] sm:$0xf]
      %v598 = vld [vmem:[%s1 + $0x4] sm:$0xf]
      %v599 = vld [vmem:[%s1 + $0x8] sm:$0xf]
      %v600 = vld [vmem:[%s1 + $0xc] sm:$0xf]
      %v601 = vld [vmem:[%s1 + $0x10] sm:$0xf]
      %v602 = vld [vmem:[%s1 + $0x14] sm:$0xf]
      %v603 = vld [vmem:[%s1 + $0x18] sm:$0xf]
      %v604 = vld [vmem:[%s1 + $0x1c] sm:$0xf]
      %v605 = vld [vmem:[%s1 + $0x20] sm:$0xf]
      %v606 = vld [vmem:[%s1 + $0x24] sm:$0xf]
      %v607 = vld [vmem:[%s1 + $0x28] sm:$0xf]
      %v608 = vld [vmem:[%s1 + $0x2c] sm:$0xf]
      %v609 = vld [vmem:[%s1 + $0x30] sm:$0xf]
      %v610 = vld [vmem:[%s1 + $0x34] sm:$0xf]
      %v611 = vld [vmem:[%s1 + $0x38] sm:$0xf]
      %v612 = vld [vmem:[%s1 + $0x3c] sm:$0xf]
      %v613 = vld [vmem:[%s2] sm:$0x1]
      %v615 = vlaneseq
      %v616 = vshrl.u32 %v615, 7
      %v617 = vsub.s32 0, %v616
      %v618 = vrot.slane %v613, %v617
      %v636 = vunpack.c.l.b16 %v597
      %v637 = vunpack.c.l.b16 %v598
      %v638 = vunpack.c.l.b16 %v599
      %v639 = vunpack.c.l.b16 %v600
      %v640 = vunpack.c.l.b16 %v601
      %v641 = vunpack.c.l.b16 %v602
      %v642 = vunpack.c.l.b16 %v603
      %v643 = vunpack.c.l.b16 %v604
      %v644 = vunpack.c.l.b16 %v605
      %v645 = vunpack.c.l.b16 %v606
      %v646 = vunpack.c.l.b16 %v607
      %v647 = vunpack.c.l.b16 %v608
      %v648 = vunpack.c.l.b16 %v609
      %v649 = vunpack.c.l.b16 %v610
      %v650 = vunpack.c.l.b16 %v611
      %v651 = vunpack.c.l.b16 %v612
      %v652 = vpack.c.b16 %v637, %v636
      %v653 = vpack.c.b16 %v639, %v638
      %v654 = vpack.c.b16 %v641, %v640
      %v655 = vpack.c.b16 %v643, %v642
      %v656 = vpack.c.b16 %v645, %v644
      %v657 = vpack.c.b16 %v647, %v646
      %v658 = vpack.c.b16 %v649, %v648
      %v659 = vpack.c.b16 %v651, %v650
      %668 = vmatprep.subr.bf16.mxu0 0
      %669 = vmatpush1.bf16.msra.mxu0 %v659
      %670 = vmatprep.subr.bf16.mxu0 0
      %671 = vmatpush1.bf16.msra.mxu0 %v658
      %672 = vmatprep.subr.bf16.mxu0 0
      %673 = vmatpush1.bf16.msra.mxu0 %v657
      %674 = vmatprep.subr.bf16.mxu0 0
      %675 = vmatpush1.bf16.msra.mxu0 %v656
      %676 = vmatprep.subr.bf16.mxu0 0
      %677 = vmatpush1.bf16.msra.mxu0 %v655
      %678 = vmatprep.subr.bf16.mxu0 0
      %679 = vmatpush1.bf16.msra.mxu0 %v654
      %680 = vmatprep.subr.bf16.mxu0 0
      %681 = vmatpush1.bf16.msra.mxu0 %v653
      %682 = vmatprep.subr.bf16.mxu0 0
      %683 = vmatpush1.bf16.msra.mxu0 %v652
      %684 = vmatprep.subr.bf16.mxu0 0
      %685 = vmatpush2.bf16.msra.mxu0 0
      %686 = vmatprep.subr.bf16.mxu0 0
      %687 = vmatpush2.bf16.msra.mxu0 0
      %688 = vmatprep.subr.bf16.mxu0 0
      %689 = vmatpush2.bf16.msra.mxu0 0
      %690 = vmatprep.subr.bf16.mxu0 0
      %691 = vmatpush2.bf16.msra.mxu0 0
      %692 = vmatprep.subr.bf16.mxu0 0
      %693 = vmatpush2.bf16.msra.mxu0 0
      %694 = vmatprep.subr.bf16.mxu0 0
      %695 = vmatpush2.bf16.msra.mxu0 0
      %696 = vmatprep.subr.bf16.mxu0 0
      %697 = vmatpush2.bf16.msra.mxu0 0
      %698 = vmatprep.subr.bf16.mxu0 0
      %699 = vmatpush2.bf16.msra.mxu0 0
      %700 = vmatprep.mubr.bf16.mxu0 0
      %701 = vmatmul.mubr.bf16.gmra.mxu0 %v583
      %v702 = vpop.f32.mrf.mxu0
      %v703 = vadd.f32 %v618, %v702
      %v704 = vpop.f32.mrf.mxu0
      %v705 = vpop.f32.mrf.mxu0
      %v706 = vadd.f32 %v618, %v705
      %v707 = vpop.f32.mrf.mxu0
      %708 = vmatprep.mubr.bf16.mxu0 0
      %709 = vmatmul.mubr.bf16.gmra.mxu0 %v586
      %v710 = vpop.f32.mrf.mxu0
      %v711 = vadd.f32 %v618, %v710
      %v712 = vpop.f32.mrf.mxu0
      %v713 = vpop.f32.mrf.mxu0
      %v714 = vadd.f32 %v618, %v713
      %v715 = vpop.f32.mrf.mxu0
      %716 = vmatprep.mubr.bf16.mxu0 0
      %717 = vmatmul.mubr.bf16.gmra.mxu0 %v589
      %v718 = vpop.f32.mrf.mxu0
      %v719 = vadd.f32 %v618, %v718
      %v720 = vpop.f32.mrf.mxu0
      %v721 = vpop.f32.mrf.mxu0
      %v722 = vadd.f32 %v618, %v721
      %v723 = vpop.f32.mrf.mxu0
      %724 = vmatprep.mubr.bf16.mxu0 0
      %725 = vmatmul.mubr.bf16.gmra.mxu0 %v592
      %v726 = vpop.f32.mrf.mxu0
      %v727 = vadd.f32 %v618, %v726
      %v728 = vpop.f32.mrf.mxu0
      %v729 = vpop.f32.mrf.mxu0
      %v730 = vadd.f32 %v618, %v729
      %v731 = vpop.f32.mrf.mxu0
      %732 = vmatprep.mubr.bf16.mxu0 0
      %733 = vmatmul.mubr.bf16.gmra.mxu0 %v595
      %v734 = vpop.f32.mrf.mxu0
      %v735 = vadd.f32 %v618, %v734
      %v736 = vpop.f32.mrf.mxu0
      %v737 = vpop.f32.mrf.mxu0
      %v738 = vadd.f32 %v618, %v737
      %v739 = vpop.f32.mrf.mxu0
      %740 = vdwg.mxu0
      %v741 = vmax.f32 %v703, 0.0
      %v742 = vmax.f32 %v706, 0.0
      %v743 = vmax.f32 %v711, 0.0
      %v744 = vmax.f32 %v714, 0.0
      %v745 = vmax.f32 %v719, 0.0
      %v746 = vmax.f32 %v722, 0.0
      %v747 = vmax.f32 %v727, 0.0
      %v748 = vmax.f32 %v730, 0.0
      %v749 = vmax.f32 %v735, 0.0
      %v750 = vmax.f32 %v738, 0.0
      %v751 = vld [vmem:[%s3] sm:$0xff]
      %v752 = vld [vmem:[%s3 + $0x8] sm:$0xff]
      %v753 = vld [vmem:[%s3 + $0x10] sm:$0xff]
      %v754 = vld [vmem:[%s3 + $0x18] sm:$0xff]
      %v755 = vld [vmem:[%s3 + $0x20] sm:$0xff]
      %v756 = vld [vmem:[%s3 + $0x28] sm:$0xff]
      %v757 = vld [vmem:[%s3 + $0x30] sm:$0xff]
      %v758 = vld [vmem:[%s3 + $0x38] sm:$0xff]
      %v759 = vld [vmem:[%s3 + $0x40] sm:$0xff]
      %v760 = vld [vmem:[%s3 + $0x48] sm:$0xff]
      %762 = vset.pattern.permute.xlu0 0
      %763 = vperm.xlu0 %762, %v751
      %v764 = vpop.permute.xlu0 %763
      %767 = vset.pattern.permute.xlu0 0
      %768 = vperm.xlu0 %767, %v752
      %v769 = vpop.permute.xlu0 %768
      %772 = vset.pattern.permute.xlu0 0
      %773 = vperm.xlu0 %772, %v753
      %v774 = vpop.permute.xlu0 %773
      %777 = vset.pattern.permute.xlu0 0
      %778 = vperm.xlu0 %777, %v754
      %v779 = vpop.permute.xlu0 %778
      %782 = vset.pattern.permute.xlu0 0
      %783 = vperm.xlu0 %782, %v755
      %v784 = vpop.permute.xlu0 %783
      %787 = vset.pattern.permute.xlu0 0
      %788 = vperm.xlu0 %787, %v756
      %v789 = vpop.permute.xlu0 %788
      %792 = vset.pattern.permute.xlu0 0
      %793 = vperm.xlu0 %792, %v757
      %v794 = vpop.permute.xlu0 %793
      %797 = vset.pattern.permute.xlu0 0
      %798 = vperm.xlu0 %797, %v758
      %v799 = vpop.permute.xlu0 %798
      %802 = vset.pattern.permute.xlu0 0
      %803 = vperm.xlu0 %802, %v759
      %v804 = vpop.permute.xlu0 %803
      %807 = vset.pattern.permute.xlu0 0
      %808 = vperm.xlu0 %807, %v760
      %v809 = vpop.permute.xlu0 %808
      %v811 = vmul.f32 %v741, %v764
      %v812 = vmul.f32 %v742, %v769
      %v813 = vmul.f32 %v743, %v774
      %v814 = vmul.f32 %v744, %v779
      %v815 = vmul.f32 %v745, %v784
      %v816 = vmul.f32 %v746, %v789
      %v817 = vmul.f32 %v747, %v794
      %v818 = vmul.f32 %v748, %v799
      %v819 = vmul.f32 %v749, %v804
      %v820 = vmul.f32 %v750, %v809
      %v821 = vpack.c.bf16 %v812, %v811
      %v822 = vpack.c.bf16 %v814, %v813
      %v823 = vpack.c.bf16 %v816, %v815
      %v824 = vpack.c.bf16 %v818, %v817
      %v825 = vpack.c.bf16 %v820, %v819
      %vm826 = vcmask 654336
      %v828 = vsel %vm826, 1065369472, 0
      %830 = vmatprep.subr.bf16.mxu0 0
      %831 = vmatpush1.bf16.msra.mxu0 0
      %832 = vmatprep.subr.bf16.mxu0 0
      %833 = vmatpush1.bf16.msra.mxu0 0
      %834 = vmatprep.subr.bf16.mxu0 0
      %835 = vmatpush1.bf16.msra.mxu0 0
      %836 = vmatprep.subr.bf16.mxu0 0
      %837 = vmatpush1.bf16.msra.mxu0 %v825
      %838 = vmatprep.subr.bf16.mxu0 0
      %839 = vmatpush1.bf16.msra.mxu0 %v824
      %840 = vmatprep.subr.bf16.mxu0 0
      %841 = vmatpush1.bf16.msra.mxu0 %v823
      %842 = vmatprep.subr.bf16.mxu0 0
      %843 = vmatpush1.bf16.msra.mxu0 %v822
      %844 = vmatprep.subr.bf16.mxu0 0
      %845 = vmatpush1.bf16.msra.mxu0 %v821
      %846 = vmatprep.subr.bf16.mxu0 0
      %847 = vmatpush2.bf16.msra.mxu0 0
      %848 = vmatprep.subr.bf16.mxu0 0
      %849 = vmatpush2.bf16.msra.mxu0 0
      %850 = vmatprep.subr.bf16.mxu0 0
      %851 = vmatpush2.bf16.msra.mxu0 0
      %852 = vmatprep.subr.bf16.mxu0 0
      %853 = vmatpush2.bf16.msra.mxu0 0
      %854 = vmatprep.subr.bf16.mxu0 0
      %855 = vmatpush2.bf16.msra.mxu0 0
      %856 = vmatprep.subr.bf16.mxu0 0
      %857 = vmatpush2.bf16.msra.mxu0 0
      %858 = vmatprep.subr.bf16.mxu0 0
      %859 = vmatpush2.bf16.msra.mxu0 0
      %860 = vmatprep.subr.bf16.mxu0 0
      %861 = vmatpush2.bf16.msra.mxu0 0
      %862 = vmatprep.mubr.bf16.mxu0 0
      %863 = vmatmul.mubr.bf16.gmra.mxu0 %v828
      %v864 = vpop.f32.mrf.mxu0
      %v865 = vadd.f32 0.0, %v864
      %v866 = vpop.f32.mrf.mxu0
      %v867 = vpop.f32.mrf.mxu0
      %v868 = vpop.f32.mrf.mxu0
      %869 = vdwg.mxu0
      %v870 = vpack.c.bf16 %v865, %v865
      %v871 = vld [vmem:[%s4] sm:$0xf]
      %v872 = vld [vmem:[%s4 + $0x4] sm:$0xf]
      %v873 = vld [vmem:[%s4 + $0x8] sm:$0xf]
      %v874 = vld [vmem:[%s4 + $0xc] sm:$0xf]
      %v875 = vld [vmem:[%s5] sm:$0x1]
      %v877 = vlaneseq
      %v878 = vshrl.u32 %v877, 7
      %v879 = vsub.s32 0, %v878
      %v880 = vrot.slane %v875, %v879
      %v886 = vunpack.c.l.b16 %v871
      %v887 = vunpack.c.l.b16 %v872
      %v888 = vunpack.c.l.b16 %v873
      %v889 = vunpack.c.l.b16 %v874
      %v890 = vpack.c.b16 %v887, %v886
      %v891 = vpack.c.b16 %v889, %v888
      %v895 = vsel %vm559, %v870, 0
      %897 = vmatprep.subr.bf16.mxu0 0
      %898 = vmatpush1.bf16.msra.mxu0 0
      %899 = vmatprep.subr.bf16.mxu0 0
      %900 = vmatpush1.bf16.msra.mxu0 0
      %901 = vmatprep.subr.bf16.mxu0 0
      %902 = vmatpush1.bf16.msra.mxu0 0
      %903 = vmatprep.subr.bf16.mxu0 0
      %904 = vmatpush1.bf16.msra.mxu0 0
      %905 = vmatprep.subr.bf16.mxu0 0
      %906 = vmatpush1.bf16.msra.mxu0 0
      %907 = vmatprep.subr.bf16.mxu0 0
      %908 = vmatpush1.bf16.msra.mxu0 0
      %909 = vmatprep.subr.bf16.mxu0 0
      %910 = vmatpush1.bf16.msra.mxu0 %v891
      %911 = vmatprep.subr.bf16.mxu0 0
      %912 = vmatpush1.bf16.msra.mxu0 %v890
      %913 = vmatprep.subr.bf16.mxu0 0
      %914 = vmatpush2.bf16.msra.mxu0 0
      %915 = vmatprep.subr.bf16.mxu0 0
      %916 = vmatpush2.bf16.msra.mxu0 0
      %917 = vmatprep.subr.bf16.mxu0 0
      %918 = vmatpush2.bf16.msra.mxu0 0
      %919 = vmatprep.subr.bf16.mxu0 0
      %920 = vmatpush2.bf16.msra.mxu0 0
      %921 = vmatprep.subr.bf16.mxu0 0
      %922 = vmatpush2.bf16.msra.mxu0 0
      %923 = vmatprep.subr.bf16.mxu0 0
      %924 = vmatpush2.bf16.msra.mxu0 0
      %925 = vmatprep.subr.bf16.mxu0 0
      %926 = vmatpush2.bf16.msra.mxu0 0
      %927 = vmatprep.subr.bf16.mxu0 0
      %928 = vmatpush2.bf16.msra.mxu0 0
      %929 = vmatprep.mubr.bf16.mxu0 0
      %930 = vmatmul.mubr.bf16.gmra.mxu0 %v895
      %v931 = vpop.f32.mrf.mxu0
      %v932 = vadd.f32 %v880, %v931
      %v933 = vpop.f32.mrf.mxu0
      %v934 = vpop.f32.mrf.mxu0
      %v935 = vpop.f32.mrf.mxu0
      %936 = vdwg.mxu0
      %937 = vst [vmem:[%s338] sm:$0xff] %v932
      %v943 = vunpack.c.l.b16 %v821
      %v944 = vunpack.c.h.b16 %v821
      %v945 = vunpack.c.l.b16 %v822
      %v946 = vunpack.c.h.b16 %v822
      %v947 = vunpack.c.l.b16 %v823
      %v948 = vunpack.c.h.b16 %v823
      %v949 = vunpack.c.l.b16 %v824
      %v950 = vunpack.c.h.b16 %v824
      %v951 = vunpack.c.l.b16 %v825
      %v952 = vunpack.c.h.b16 %v825
      %v953 = vpack.c.b16 %v943, %v943
      %v954 = vpack.c.b16 %v944, %v944
      %v955 = vpack.c.b16 %v945, %v945
      %v956 = vpack.c.b16 %v946, %v946
      %v957 = vpack.c.b16 %v947, %v947
      %v958 = vpack.c.b16 %v948, %v948
      %v959 = vpack.c.b16 %v949, %v949
      %v960 = vpack.c.b16 %v950, %v950
      %v961 = vpack.c.b16 %v951, %v951
      %v962 = vpack.c.b16 %v952, %v952
      %vm963 = vsmask.f32 1280
      %vm964 = vsmask.f32 5392
      %vm965 = vmor %vm963, %vm964
      %v967 = vshrl.u32 %v953, 16
      %v969 = vrot.slane %v967, 6
      %v970 = vshll.u32 %v953, 16
      %v972 = vrot.slane %v970, 7
      %v973 = vor.u32 %v969, %v972
      %v974 = vrot.slane %v973, 4
      %v976 = vshrl.u32 %v954, 16
      %v978 = vrot.slane %v976, 6
      %v979 = vshll.u32 %v954, 16
      %v981 = vrot.slane %v979, 7
      %v982 = vor.u32 %v978, %v981
      %v983 = vsel %vm965, %v974, %v982
      %v984 = vrot.slane %v982, 4
      %v986 = vshrl.u32 %v955, 16
      %v988 = vrot.slane %v986, 6
      %v989 = vshll.u32 %v955, 16
      %v991 = vrot.slane %v989, 7
      %v992 = vor.u32 %v988, %v991
      %v993 = vsel %vm965, %v984, %v992
      %v994 = vrot.slane %v992, 4
      %v996 = vshrl.u32 %v956, 16
      %v998 = vrot.slane %v996, 6
      %v999 = vshll.u32 %v956, 16
      %v1001 = vrot.slane %v999, 7
      %v1002 = vor.u32 %v998, %v1001
      %v1003 = vsel %vm965, %v994, %v1002
      %v1004 = vrot.slane %v1002, 4
      %v1006 = vshrl.u32 %v957, 16
      %v1008 = vrot.slane %v1006, 6
      %v1009 = vshll.u32 %v957, 16
      %v1011 = vrot.slane %v1009, 7
      %v1012 = vor.u32 %v1008, %v1011
      %v1013 = vsel %vm965, %v1004, %v1012
      %v1014 = vrot.slane %v1012, 4
      %v1016 = vshrl.u32 %v958, 16
      %v1018 = vrot.slane %v1016, 6
      %v1019 = vshll.u32 %v958, 16
      %v1021 = vrot.slane %v1019, 7
      %v1022 = vor.u32 %v1018, %v1021
      %v1023 = vsel %vm965, %v1014, %v1022
      %v1024 = vrot.slane %v1022, 4
      %v1026 = vshrl.u32 %v959, 16
      %v1028 = vrot.slane %v1026, 6
      %v1029 = vshll.u32 %v959, 16
      %v1031 = vrot.slane %v1029, 7
      %v1032 = vor.u32 %v1028, %v1031
      %v1033 = vsel %vm965, %v1024, %v1032
      %v1034 = vrot.slane %v1032, 4
      %v1036 = vshrl.u32 %v960, 16
      %v1038 = vrot.slane %v1036, 6
      %v1039 = vshll.u32 %v960, 16
      %v1041 = vrot.slane %v1039, 7
      %v1042 = vor.u32 %v1038, %v1041
      %v1043 = vsel %vm965, %v1034, %v1042
      %v1044 = vrot.slane %v1042, 4
      %v1046 = vshrl.u32 %v961, 16
      %v1048 = vrot.slane %v1046, 6
      %v1049 = vshll.u32 %v961, 16
      %v1051 = vrot.slane %v1049, 7
      %v1052 = vor.u32 %v1048, %v1051
      %v1053 = vsel %vm965, %v1044, %v1052
      %v1054 = vrot.slane %v1052, 4
      %v1056 = vshrl.u32 %v962, 16
      %v1058 = vrot.slane %v1056, 6
      %v1059 = vshll.u32 %v962, 16
      %v1061 = vrot.slane %v1059, 7
      %v1062 = vor.u32 %v1058, %v1061
      %v1063 = vsel %vm965, %v1054, %v1062
      %v1064 = vrot.slane %v1062, 4
      %vm1076 = vcmask 257025
      %vm1077 = vsmask.f32 7942
      %vm1078 = vmand %vm1076, %vm1077
      %v1079 = vld [vmem:[#allocation2 + $0x4] sm:$0xe]
      %v1080 = vsel %vm1078, %v973, %v1079
      %1081 = vst [vmem:[#allocation2 + $0x4] sm:$0xe] %v1080
      %1082 = vst.msk [vmem:[#allocation2 + $0x8] sm:$0xf] %vm346, %v983
      %1083 = vst.msk [vmem:[#allocation2 + $0xc] sm:$0xf] %vm346, %v993
      %1084 = vst.msk [vmem:[#allocation2 + $0x10] sm:$0xf] %vm346, %v1003
      %1085 = vst.msk [vmem:[#allocation2 + $0x14] sm:$0xf] %vm346, %v1013
      %1086 = vst.msk [vmem:[#allocation2 + $0x18] sm:$0xf] %vm346, %v1023
      %1087 = vst.msk [vmem:[#allocation2 + $0x1c] sm:$0xf] %vm346, %v1033
      %1088 = vst.msk [vmem:[#allocation2 + $0x20] sm:$0xf] %vm346, %v1043
      %1089 = vst.msk [vmem:[#allocation2 + $0x24] sm:$0xf] %vm346, %v1053
      %1090 = vst.msk [vmem:[#allocation2 + $0x28] sm:$0xf] %vm346, %v1063
      %vm1091 = vcmask 254976
      %vm1092 = vmand %vm1091, %vm963
      %v1093 = vld [vmem:[#allocation2 + $0x2c] sm:$0x3]
      %v1094 = vsel %vm1092, %v1064, %v1093
      %1095 = vst [vmem:[#allocation2 + $0x2c] sm:$0x3] %v1094
      %v1096 = vld [vmem:[#allocation2] sm:$0xf]
      %v1097 = vld [vmem:[#allocation2 + $0x4] sm:$0xf]
      %v1098 = vld [vmem:[#allocation2 + $0x8] sm:$0xf]
      %v1099 = vld [vmem:[#allocation2 + $0xc] sm:$0xf]
      %v1100 = vld [vmem:[#allocation2 + $0x10] sm:$0xf]
      %v1101 = vld [vmem:[#allocation2 + $0x14] sm:$0xf]
      %v1102 = vld [vmem:[#allocation2 + $0x18] sm:$0xf]
      %v1103 = vld [vmem:[#allocation2 + $0x1c] sm:$0xf]
      %v1104 = vld [vmem:[#allocation2 + $0x20] sm:$0xf]
      %v1105 = vld [vmem:[#allocation2 + $0x24] sm:$0xf]
      %v1106 = vld [vmem:[#allocation2 + $0x28] sm:$0x1]
      %v1107 = vld [vmem:[#allocation2] sm:$0xe]
      %v1108 = vld [vmem:[#allocation2 + $0x4] sm:$0xe]
      %v1109 = vld [vmem:[#allocation2 + $0x28] sm:$0xf]
      %v1110 = vld [vmem:[#allocation2 + $0x2c] sm:$0x1]
      %v1111 = vld [vmem:[#allocation2 + $0x2c] sm:$0x3]
      %v1112 = vld [vmem:[#allocation2 + $0x4] sm:$0xc]
      %v1113 = vld [vmem:[#allocation2 + $0x8] sm:$0xc]
      %v1114 = vld [vmem:[#allocation2 + $0x2c] sm:$0xf]
      %v1115 = vld [vmem:[#allocation2 + $0x30] sm:$0x3]
      %v1116 = vld [vmem:[#allocation2 + $0x30] sm:$0x7]
      %v1117 = vld [vmem:[#allocation2 + $0x8] sm:$0x8]
      %v1128 = vunpack.c.l.b16 %v1096
      %v1129 = vunpack.c.l.b16 %v1097
      %v1130 = vunpack.c.l.b16 %v1098
      %v1131 = vunpack.c.l.b16 %v1099
      %v1132 = vunpack.c.l.b16 %v1100
      %v1133 = vunpack.c.l.b16 %v1101
      %v1134 = vunpack.c.l.b16 %v1102
      %v1135 = vunpack.c.l.b16 %v1103
      %v1136 = vunpack.c.l.b16 %v1104
      %v1137 = vunpack.c.l.b16 %v1105
      %v1138 = vpack.c.b16 %v1129, %v1128
      %v1139 = vpack.c.b16 %v1131, %v1130
      %v1140 = vpack.c.b16 %v1133, %v1132
      %v1141 = vpack.c.b16 %v1135, %v1134
      %v1142 = vpack.c.b16 %v1137, %v1136
      %v1144 = vunpack.c.l.b16 %v1106
      %v1145 = vpack.c.b16 %v1144, %v1144
      %v1147 = vshrl.u32 %v1138, 16
      %v1149 = vshll.u32 %v1138, 16
      %v1151 = vrot.slane %v1149, 1
      %v1152 = vor.u32 %v1147, %v1151
      %v1154 = vshll.u32 %v1139, 16
      %v1156 = vrot.slane %v1154, 1
      %v1157 = vsel %vm403, %v1152, %v1156
      %v1158 = vshrl.u32 %v1139, 16
      %v1160 = vor.u32 %v1158, %v1156
      %v1162 = vshll.u32 %v1140, 16
      %v1164 = vrot.slane %v1162, 1
      %v1165 = vsel %vm403, %v1160, %v1164
      %v1166 = vshrl.u32 %v1140, 16
      %v1168 = vor.u32 %v1166, %v1164
      %v1170 = vshll.u32 %v1141, 16
      %v1172 = vrot.slane %v1170, 1
      %v1173 = vsel %vm403, %v1168, %v1172
      %v1174 = vshrl.u32 %v1141, 16
      %v1176 = vor.u32 %v1174, %v1172
      %v1178 = vshll.u32 %v1142, 16
      %v1180 = vrot.slane %v1178, 1
      %v1181 = vsel %vm403, %v1176, %v1180
      %v1182 = vshrl.u32 %v1142, 16
      %v1184 = vor.u32 %v1182, %v1180
      %v1186 = vshll.u32 %v1145, 16
      %v1188 = vrot.slane %v1186, 1
      %v1189 = vsel %vm403, %v1184, %v1188
      %1190 = vrot.lane.b32.xlu0 %v1157, 32
      %v1191 = vpop.permute.xlu0 %1190
      %1192 = vrot.lane.b32.xlu0 %v1165, 32
      %v1193 = vpop.permute.xlu0 %1192
      %1194 = vrot.lane.b32.xlu0 %v1173, 32
      %v1195 = vpop.permute.xlu0 %1194
      %1196 = vrot.lane.b32.xlu0 %v1181, 32
      %v1197 = vpop.permute.xlu0 %1196
      %1198 = vrot.lane.b32.xlu0 %v1189, 32
      %v1199 = vpop.permute.xlu0 %1198
      %v1201 = vunpack.c.l.b16 %v1107
      %v1202 = vpack.c.b16 %v1129, %v1201
      %v1203 = vrot.slane %v1202, 1
      %v1204 = vrot.slane %v1139, 1
      %v1205 = vsel %vm470, %v1203, %v1204
      %v1206 = vrot.slane %v1140, 1
      %v1207 = vsel %vm470, %v1204, %v1206
      %v1208 = vrot.slane %v1141, 1
      %v1209 = vsel %vm470, %v1206, %v1208
      %v1210 = vrot.slane %v1142, 1
      %v1211 = vsel %vm470, %v1208, %v1210
      %v1212 = vrot.slane %v1145, 1
      %v1213 = vsel %vm470, %v1210, %v1212
      %1214 = vrot.lane.b32.xlu0 %v1205, 64
      %v1215 = vpop.permute.xlu0 %1214
      %1216 = vrot.lane.b32.xlu0 %v1207, 64
      %v1217 = vpop.permute.xlu0 %1216
      %1218 = vrot.lane.b32.xlu0 %v1209, 64
      %v1219 = vpop.permute.xlu0 %1218
      %1220 = vrot.lane.b32.xlu0 %v1211, 64
      %v1221 = vpop.permute.xlu0 %1220
      %1222 = vrot.lane.b32.xlu0 %v1213, 64
      %v1223 = vpop.permute.xlu0 %1222
      %v1227 = vunpack.c.l.b16 %v1108
      %v1228 = vunpack.c.l.b16 %v1109
      %v1229 = vunpack.c.l.b16 %v1110
      %v1230 = vpack.c.b16 %v1130, %v1227
      %v1231 = vpack.c.b16 %v1132, %v1131
      %v1232 = vpack.c.b16 %v1134, %v1133
      %v1233 = vpack.c.b16 %v1136, %v1135
      %v1234 = vpack.c.b16 %v1228, %v1137
      %v1235 = vpack.c.b16 %v1229, %v1229
      %v1236 = vrot.slane %v1230, 1
      %v1237 = vrot.slane %v1231, 1
      %v1238 = vsel %vm470, %v1236, %v1237
      %v1239 = vrot.slane %v1232, 1
      %v1240 = vsel %vm470, %v1237, %v1239
      %v1241 = vrot.slane %v1233, 1
      %v1242 = vsel %vm470, %v1239, %v1241
      %v1243 = vrot.slane %v1234, 1
      %v1244 = vsel %vm470, %v1241, %v1243
      %v1245 = vrot.slane %v1235, 1
      %v1246 = vsel %vm470, %v1243, %v1245
      %1247 = vrot.lane.b32.xlu0 %v1238, 96
      %v1248 = vpop.permute.xlu0 %1247
      %1249 = vrot.lane.b32.xlu0 %v1240, 96
      %v1250 = vpop.permute.xlu0 %1249
      %1251 = vrot.lane.b32.xlu0 %v1242, 96
      %v1252 = vpop.permute.xlu0 %1251
      %1253 = vrot.lane.b32.xlu0 %v1244, 96
      %v1254 = vpop.permute.xlu0 %1253
      %1255 = vrot.lane.b32.xlu0 %v1246, 96
      %v1256 = vpop.permute.xlu0 %1255
      %v1258 = vunpack.c.l.b16 %v1111
      %v1259 = vpack.c.b16 %v1258, %v1258
      %v1261 = vshrl.u32 %v1230, 16
      %v1263 = vrot.slane %v1261, 1
      %v1264 = vshll.u32 %v1230, 16
      %v1266 = vrot.slane %v1264, 2
      %v1267 = vor.u32 %v1263, %v1266
      %v1269 = vshrl.u32 %v1231, 16
      %v1271 = vrot.slane %v1269, 1
      %v1272 = vshll.u32 %v1231, 16
      %v1274 = vrot.slane %v1272, 2
      %v1275 = vor.u32 %v1271, %v1274
      %v1276 = vsel %vm495, %v1267, %v1275
      %v1278 = vshrl.u32 %v1232, 16
      %v1280 = vrot.slane %v1278, 1
      %v1281 = vshll.u32 %v1232, 16
      %v1283 = vrot.slane %v1281, 2
      %v1284 = vor.u32 %v1280, %v1283
      %v1285 = vsel %vm495, %v1275, %v1284
      %v1287 = vshrl.u32 %v1233, 16
      %v1289 = vrot.slane %v1287, 1
      %v1290 = vshll.u32 %v1233, 16
      %v1292 = vrot.slane %v1290, 2
      %v1293 = vor.u32 %v1289, %v1292
      %v1294 = vsel %vm495, %v1284, %v1293
      %v1296 = vshrl.u32 %v1234, 16
      %v1298 = vrot.slane %v1296, 1
      %v1299 = vshll.u32 %v1234, 16
      %v1301 = vrot.slane %v1299, 2
      %v1302 = vor.u32 %v1298, %v1301
      %v1303 = vsel %vm495, %v1293, %v1302
      %v1305 = vshrl.u32 %v1259, 16
      %v1307 = vrot.slane %v1305, 1
      %v1308 = vshll.u32 %v1259, 16
      %v1310 = vrot.slane %v1308, 2
      %v1311 = vor.u32 %v1307, %v1310
      %v1312 = vsel %vm495, %v1302, %v1311
      %v1314 = vunpack.c.l.b16 %v1112
      %v1315 = vpack.c.b16 %v1130, %v1314
      %vm1316 = vcmask 1045504
      %v1317 = vrot.slane %v1315, 2
      %v1318 = vrot.slane %v1231, 2
      %v1319 = vsel %vm1316, %v1317, %v1318
      %v1320 = vrot.slane %v1232, 2
      %v1321 = vsel %vm1316, %v1318, %v1320
      %v1322 = vrot.slane %v1233, 2
      %v1323 = vsel %vm1316, %v1320, %v1322
      %v1324 = vrot.slane %v1234, 2
      %v1325 = vsel %vm1316, %v1322, %v1324
      %v1326 = vrot.slane %v1259, 2
      %v1327 = vsel %vm1316, %v1324, %v1326
      %1328 = vrot.lane.b32.xlu0 %v1319, 32
      %v1329 = vpop.permute.xlu0 %1328
      %1330 = vrot.lane.b32.xlu0 %v1321, 32
      %v1331 = vpop.permute.xlu0 %1330
      %1332 = vrot.lane.b32.xlu0 %v1323, 32
      %v1333 = vpop.permute.xlu0 %1332
      %1334 = vrot.lane.b32.xlu0 %v1325, 32
      %v1335 = vpop.permute.xlu0 %1334
      %1336 = vrot.lane.b32.xlu0 %v1327, 32
      %v1337 = vpop.permute.xlu0 %1336
      %v1341 = vunpack.c.l.b16 %v1113
      %v1342 = vunpack.c.l.b16 %v1114
      %v1343 = vunpack.c.l.b16 %v1115
      %v1344 = vpack.c.b16 %v1131, %v1341
      %v1345 = vpack.c.b16 %v1342, %v1228
      %v1346 = vpack.c.b16 %v1343, %v1343
      %v1347 = vrot.slane %v1344, 2
      %v1348 = vrot.slane %v1140, 2
      %v1349 = vsel %vm1316, %v1347, %v1348
      %v1350 = vrot.slane %v1141, 2
      %v1351 = vsel %vm1316, %v1348, %v1350
      %v1352 = vrot.slane %v1142, 2
      %v1353 = vsel %vm1316, %v1350, %v1352
      %v1354 = vrot.slane %v1345, 2
      %v1355 = vsel %vm1316, %v1352, %v1354
      %v1356 = vrot.slane %v1346, 2
      %v1357 = vsel %vm1316, %v1354, %v1356
      %1358 = vrot.lane.b32.xlu0 %v1349, 64
      %v1359 = vpop.permute.xlu0 %1358
      %1360 = vrot.lane.b32.xlu0 %v1351, 64
      %v1361 = vpop.permute.xlu0 %1360
      %1362 = vrot.lane.b32.xlu0 %v1353, 64
      %v1363 = vpop.permute.xlu0 %1362
      %1364 = vrot.lane.b32.xlu0 %v1355, 64
      %v1365 = vpop.permute.xlu0 %1364
      %1366 = vrot.lane.b32.xlu0 %v1357, 64
      %v1367 = vpop.permute.xlu0 %1366
      %v1369 = vunpack.c.l.b16 %v1116
      %v1370 = vpack.c.b16 %v1369, %v1369
      %vm1371 = vsmask.f32 5376
      %v1373 = vshrl.u32 %v1344, 16
      %v1375 = vrot.slane %v1373, 2
      %v1376 = vshll.u32 %v1344, 16
      %v1378 = vrot.slane %v1376, 3
      %v1379 = vor.u32 %v1375, %v1378
      %v1380 = vrot.slane %v1166, 2
      %v1381 = vrot.slane %v1162, 3
      %v1382 = vor.u32 %v1380, %v1381
      %v1383 = vsel %vm1371, %v1379, %v1382
      %v1384 = vrot.slane %v1174, 2
      %v1385 = vrot.slane %v1170, 3
      %v1386 = vor.u32 %v1384, %v1385
      %v1387 = vsel %vm1371, %v1382, %v1386
      %v1388 = vrot.slane %v1182, 2
      %v1389 = vrot.slane %v1178, 3
      %v1390 = vor.u32 %v1388, %v1389
      %v1391 = vsel %vm1371, %v1386, %v1390
      %v1393 = vshrl.u32 %v1345, 16
      %v1395 = vrot.slane %v1393, 2
      %v1396 = vshll.u32 %v1345, 16
      %v1398 = vrot.slane %v1396, 3
      %v1399 = vor.u32 %v1395, %v1398
      %v1400 = vsel %vm1371, %v1390, %v1399
      %v1402 = vshrl.u32 %v1370, 16
      %v1404 = vrot.slane %v1402, 2
      %v1405 = vshll.u32 %v1370, 16
      %v1407 = vrot.slane %v1405, 3
      %v1408 = vor.u32 %v1404, %v1407
      %v1409 = vsel %vm1371, %v1399, %v1408
      %1410 = vrot.lane.b32.xlu0 %v1383, 96
      %v1411 = vpop.permute.xlu0 %1410
      %1412 = vrot.lane.b32.xlu0 %v1387, 96
      %v1413 = vpop.permute.xlu0 %1412
      %1414 = vrot.lane.b32.xlu0 %v1391, 96
      %v1415 = vpop.permute.xlu0 %1414
      %1416 = vrot.lane.b32.xlu0 %v1400, 96
      %v1417 = vpop.permute.xlu0 %1416
      %1418 = vrot.lane.b32.xlu0 %v1409, 96
      %v1419 = vpop.permute.xlu0 %1418
      %v1421 = vunpack.c.l.b16 %v1117
      %v1422 = vpack.c.b16 %v1131, %v1421
      %vm1423 = vcmask 1044480
      %v1424 = vrot.slane %v1422, 3
      %v1425 = vrot.slane %v1140, 3
      %v1426 = vsel %vm1423, %v1424, %v1425
      %v1427 = vrot.slane %v1141, 3
      %v1428 = vsel %vm1423, %v1425, %v1427
      %v1429 = vrot.slane %v1142, 3
      %v1430 = vsel %vm1423, %v1427, %v1429
      %v1431 = vrot.slane %v1345, 3
      %v1432 = vsel %vm1423, %v1429, %v1431
      %v1433 = vrot.slane %v1370, 3
      %v1434 = vsel %vm1423, %v1431, %v1433
      %v1436 = vsel %vm559, %v1138, %v1191
      %v1438 = vsel %vm559, %v1139, %v1193
      %v1440 = vsel %vm559, %v1140, %v1195
      %v1442 = vsel %vm559, %v1141, %v1197
      %v1444 = vsel %vm559, %v1142, %v1199
      %v1446 = vsel %vm570, %v1436, %v1215
      %v1448 = vsel %vm570, %v1438, %v1217
      %v1450 = vsel %vm570, %v1440, %v1219
      %v1452 = vsel %vm570, %v1442, %v1221
      %v1454 = vsel %vm570, %v1444, %v1223
      %v1456 = vsel %vm581, %v1446, %v1248
      %v1459 = vsel %vm581, %v1448, %v1250
      %v1462 = vsel %vm581, %v1450, %v1252
      %v1465 = vsel %vm581, %v1452, %v1254
      %v1468 = vsel %vm581, %v1454, %v1256
      %v1472 = vsel %vm559, %v1276, %v1329
      %v1475 = vsel %vm559, %v1285, %v1331
      %v1478 = vsel %vm559, %v1294, %v1333
      %v1481 = vsel %vm559, %v1303, %v1335
      %v1484 = vsel %vm559, %v1312, %v1337
      %v1486 = vsel %vm570, %v1472, %v1359
      %v1488 = vsel %vm570, %v1475, %v1361
      %v1490 = vsel %vm570, %v1478, %v1363
      %v1492 = vsel %vm570, %v1481, %v1365
      %v1494 = vsel %vm570, %v1484, %v1367
      %v1496 = vsel %vm581, %v1486, %v1411
      %v1499 = vsel %vm581, %v1488, %v1413
      %v1502 = vsel %vm581, %v1490, %v1415
      %v1505 = vsel %vm581, %v1492, %v1417
      %v1508 = vsel %vm581, %v1494, %v1419
      %v1510 = vld [vmem:[%s6] sm:$0xf]
      %v1511 = vld [vmem:[%s6 + $0x4] sm:$0xf]
      %v1512 = vld [vmem:[%s6 + $0x8] sm:$0xf]
      %v1513 = vld [vmem:[%s6 + $0xc] sm:$0xf]
      %v1514 = vld [vmem:[%s6 + $0x10] sm:$0xf]
      %v1515 = vld [vmem:[%s6 + $0x14] sm:$0xf]
      %v1516 = vld [vmem:[%s6 + $0x18] sm:$0xf]
      %v1517 = vld [vmem:[%s6 + $0x1c] sm:$0xf]
      %v1518 = vld [vmem:[%s6 + $0x20] sm:$0xf]
      %v1519 = vld [vmem:[%s6 + $0x24] sm:$0xf]
      %v1520 = vld [vmem:[%s6 + $0x28] sm:$0xf]
      %v1521 = vld [vmem:[%s6 + $0x2c] sm:$0xf]
      %v1522 = vld [vmem:[%s6 + $0x30] sm:$0xf]
      %v1523 = vld [vmem:[%s6 + $0x34] sm:$0xf]
      %v1524 = vld [vmem:[%s6 + $0x38] sm:$0xf]
      %v1525 = vld [vmem:[%s6 + $0x3c] sm:$0xf]
      %v1526 = vld [vmem:[%s6 + $0x40] sm:$0xf]
      %v1527 = vld [vmem:[%s6 + $0x44] sm:$0xf]
      %v1528 = vld [vmem:[%s6 + $0x48] sm:$0xf]
      %v1529 = vld [vmem:[%s6 + $0x4c] sm:$0xf]
      %v1530 = vld [vmem:[%s6 + $0x50] sm:$0xf]
      %v1531 = vld [vmem:[%s6 + $0x54] sm:$0xf]
      %v1532 = vld [vmem:[%s6 + $0x58] sm:$0xf]
      %v1533 = vld [vmem:[%s6 + $0x5c] sm:$0xf]
      %v1534 = vld [vmem:[%s6 + $0x60] sm:$0xf]
      %v1535 = vld [vmem:[%s6 + $0x64] sm:$0xf]
      %v1536 = vld [vmem:[%s6 + $0x68] sm:$0xf]
      %v1537 = vld [vmem:[%s6 + $0x6c] sm:$0xf]
      %v1538 = vld [vmem:[%s6 + $0x70] sm:$0xf]
      %v1539 = vld [vmem:[%s6 + $0x74] sm:$0xf]
      %v1540 = vld [vmem:[%s6 + $0x78] sm:$0xf]
      %v1541 = vld [vmem:[%s6 + $0x7c] sm:$0xf]
      %v1542 = vld [vmem:[%s6 + $0x80] sm:$0xf]
      %v1543 = vld [vmem:[%s6 + $0x84] sm:$0xf]
      %v1544 = vld [vmem:[%s6 + $0x88] sm:$0xf]
      %v1545 = vld [vmem:[%s6 + $0x8c] sm:$0xf]
      %v1546 = vld [vmem:[%s7] sm:$0x1]
      %v1548 = vlaneseq
      %v1549 = vshrl.u32 %v1548, 7
      %v1550 = vsub.s32 0, %v1549
      %v1551 = vrot.slane %v1546, %v1550
      %v1589 = vunpack.c.l.b16 %v1510
      %v1590 = vunpack.c.l.b16 %v1511
      %v1591 = vunpack.c.l.b16 %v1512
      %v1592 = vunpack.c.l.b16 %v1513
      %v1593 = vunpack.c.l.b16 %v1514
      %v1594 = vunpack.c.l.b16 %v1515
      %v1595 = vunpack.c.l.b16 %v1516
      %v1596 = vunpack.c.l.b16 %v1517
      %v1597 = vunpack.c.l.b16 %v1518
      %v1598 = vunpack.c.l.b16 %v1519
      %v1599 = vunpack.c.l.b16 %v1520
      %v1600 = vunpack.c.l.b16 %v1521
      %v1601 = vunpack.c.l.b16 %v1522
      %v1602 = vunpack.c.l.b16 %v1523
      %v1603 = vunpack.c.l.b16 %v1524
      %v1604 = vunpack.c.l.b16 %v1525
      %v1605 = vunpack.c.l.b16 %v1526
      %v1606 = vunpack.c.l.b16 %v1527
      %v1607 = vunpack.c.l.b16 %v1528
      %v1608 = vunpack.c.l.b16 %v1529
      %v1609 = vunpack.c.l.b16 %v1530
      %v1610 = vunpack.c.l.b16 %v1531
      %v1611 = vunpack.c.l.b16 %v1532
      %v1612 = vunpack.c.l.b16 %v1533
      %v1613 = vunpack.c.l.b16 %v1534
      %v1614 = vunpack.c.l.b16 %v1535
      %v1615 = vunpack.c.l.b16 %v1536
      %v1616 = vunpack.c.l.b16 %v1537
      %v1617 = vunpack.c.l.b16 %v1538
      %v1618 = vunpack.c.l.b16 %v1539
      %v1619 = vunpack.c.l.b16 %v1540
      %v1620 = vunpack.c.l.b16 %v1541
      %v1621 = vunpack.c.l.b16 %v1542
      %v1622 = vunpack.c.l.b16 %v1543
      %v1623 = vunpack.c.l.b16 %v1544
      %v1624 = vunpack.c.l.b16 %v1545
      %v1625 = vpack.c.b16 %v1590, %v1589
      %v1626 = vpack.c.b16 %v1592, %v1591
      %v1627 = vpack.c.b16 %v1594, %v1593
      %v1628 = vpack.c.b16 %v1596, %v1595
      %v1629 = vpack.c.b16 %v1598, %v1597
      %v1630 = vpack.c.b16 %v1600, %v1599
      %v1631 = vpack.c.b16 %v1602, %v1601
      %v1632 = vpack.c.b16 %v1604, %v1603
      %v1633 = vpack.c.b16 %v1606, %v1605
      %v1634 = vpack.c.b16 %v1608, %v1607
      %v1635 = vpack.c.b16 %v1610, %v1609
      %v1636 = vpack.c.b16 %v1612, %v1611
      %v1637 = vpack.c.b16 %v1614, %v1613
      %v1638 = vpack.c.b16 %v1616, %v1615
      %v1639 = vpack.c.b16 %v1618, %v1617
      %v1640 = vpack.c.b16 %v1620, %v1619
      %v1641 = vpack.c.b16 %v1622, %v1621
      %v1642 = vpack.c.b16 %v1624, %v1623
      %v1662 = vsel %vm559, %v1426, 0
      %v1665 = vsel %vm559, %v1428, 0
      %v1668 = vsel %vm559, %v1430, 0
      %v1671 = vsel %vm559, %v1432, 0
      %v1674 = vsel %vm559, %v1434, 0
      %1676 = vmatprep.subr.bf16.mxu0 0
      %1677 = vmatpush1.bf16.msra.mxu0 %v1632
      %1678 = vmatprep.subr.bf16.mxu0 0
      %1679 = vmatpush1.bf16.msra.mxu0 %v1631
      %1680 = vmatprep.subr.bf16.mxu0 0
      %1681 = vmatpush1.bf16.msra.mxu0 %v1630
      %1682 = vmatprep.subr.bf16.mxu0 0
      %1683 = vmatpush1.bf16.msra.mxu0 %v1629
      %1684 = vmatprep.subr.bf16.mxu0 0
      %1685 = vmatpush1.bf16.msra.mxu0 %v1628
      %1686 = vmatprep.subr.bf16.mxu0 0
      %1687 = vmatpush1.bf16.msra.mxu0 %v1627
      %1688 = vmatprep.subr.bf16.mxu0 0
      %1689 = vmatpush1.bf16.msra.mxu0 %v1626
      %1690 = vmatprep.subr.bf16.mxu0 0
      %1691 = vmatpush1.bf16.msra.mxu0 %v1625
      %1692 = vmatprep.subr.bf16.mxu0 0
      %1693 = vmatpush2.bf16.msra.mxu0 %v1640
      %1694 = vmatprep.subr.bf16.mxu0 0
      %1695 = vmatpush2.bf16.msra.mxu0 %v1639
      %1696 = vmatprep.subr.bf16.mxu0 0
      %1697 = vmatpush2.bf16.msra.mxu0 %v1638
      %1698 = vmatprep.subr.bf16.mxu0 0
      %1699 = vmatpush2.bf16.msra.mxu0 %v1637
      %1700 = vmatprep.subr.bf16.mxu0 0
      %1701 = vmatpush2.bf16.msra.mxu0 %v1636
      %1702 = vmatprep.subr.bf16.mxu0 0
      %1703 = vmatpush2.bf16.msra.mxu0 %v1635
      %1704 = vmatprep.subr.bf16.mxu0 0
      %1705 = vmatpush2.bf16.msra.mxu0 %v1634
      %1706 = vmatprep.subr.bf16.mxu0 0
      %1707 = vmatpush2.bf16.msra.mxu0 %v1633
      %1708 = vmatprep.mubr.bf16.mxu0 %v1496
      %1709 = vmatmul.mubr.bf16.gmra.mxu0 %v1456
      %v1710 = vpop.f32.mrf.mxu0
      %v1711 = vadd.f32 %v1551, %v1710
      %v1712 = vpop.f32.mrf.mxu0
      %v1713 = vpop.f32.mrf.mxu0
      %v1714 = vadd.f32 %v1551, %v1713
      %v1715 = vpop.f32.mrf.mxu0
      %1716 = vmatprep.mubr.bf16.mxu0 %v1499
      %1717 = vmatmul.mubr.bf16.gmra.mxu0 %v1459
      %v1718 = vpop.f32.mrf.mxu0
      %v1719 = vadd.f32 %v1551, %v1718
      %v1720 = vpop.f32.mrf.mxu0
      %v1721 = vpop.f32.mrf.mxu0
      %v1722 = vadd.f32 %v1551, %v1721
      %v1723 = vpop.f32.mrf.mxu0
      %1724 = vmatprep.mubr.bf16.mxu0 %v1502
      %1725 = vmatmul.mubr.bf16.gmra.mxu0 %v1462
      %v1726 = vpop.f32.mrf.mxu0
      %v1727 = vadd.f32 %v1551, %v1726
      %v1728 = vpop.f32.mrf.mxu0
      %v1729 = vpop.f32.mrf.mxu0
      %v1730 = vadd.f32 %v1551, %v1729
      %v1731 = vpop.f32.mrf.mxu0
      %1732 = vmatprep.mubr.bf16.mxu0 %v1505
      %1733 = vmatmul.mubr.bf16.gmra.mxu0 %v1465
      %v1734 = vpop.f32.mrf.mxu0
      %v1735 = vadd.f32 %v1551, %v1734
      %v1736 = vpop.f32.mrf.mxu0
      %v1737 = vpop.f32.mrf.mxu0
      %v1738 = vadd.f32 %v1551, %v1737
      %v1739 = vpop.f32.mrf.mxu0
      %1740 = vmatprep.mubr.bf16.mxu0 %v1508
      %1741 = vmatmul.mubr.bf16.gmra.mxu0 %v1468
      %v1742 = vpop.f32.mrf.mxu0
      %v1743 = vadd.f32 %v1551, %v1742
      %v1744 = vpop.f32.mrf.mxu0
      %v1745 = vpop.f32.mrf.mxu0
      %v1746 = vadd.f32 %v1551, %v1745
      %v1747 = vpop.f32.mrf.mxu0
      %1748 = vdwg.mxu0
      %1749 = vmatprep.subr.bf16.mxu0 0
      %1750 = vmatpush1.bf16.msra.mxu0 0
      %1751 = vmatprep.subr.bf16.mxu0 0
      %1752 = vmatpush1.bf16.msra.mxu0 0
      %1753 = vmatprep.subr.bf16.mxu0 0
      %1754 = vmatpush1.bf16.msra.mxu0 0
      %1755 = vmatprep.subr.bf16.mxu0 0
      %1756 = vmatpush1.bf16.msra.mxu0 0
      %1757 = vmatprep.subr.bf16.mxu0 0
      %1758 = vmatpush1.bf16.msra.mxu0 0
      %1759 = vmatprep.subr.bf16.mxu0 0
      %1760 = vmatpush1.bf16.msra.mxu0 0
      %1761 = vmatprep.subr.bf16.mxu0 0
      %1762 = vmatpush1.bf16.msra.mxu0 %v1642
      %1763 = vmatprep.subr.bf16.mxu0 0
      %1764 = vmatpush1.bf16.msra.mxu0 %v1641
      %1765 = vmatprep.subr.bf16.mxu0 0
      %1766 = vmatpush2.bf16.msra.mxu0 0
      %1767 = vmatprep.subr.bf16.mxu0 0
      %1768 = vmatpush2.bf16.msra.mxu0 0
      %1769 = vmatprep.subr.bf16.mxu0 0
      %1770 = vmatpush2.bf16.msra.mxu0 0
      %1771 = vmatprep.subr.bf16.mxu0 0
      %1772 = vmatpush2.bf16.msra.mxu0 0
      %1773 = vmatprep.subr.bf16.mxu0 0
      %1774 = vmatpush2.bf16.msra.mxu0 0
      %1775 = vmatprep.subr.bf16.mxu0 0
      %1776 = vmatpush2.bf16.msra.mxu0 0
      %1777 = vmatprep.subr.bf16.mxu0 0
      %1778 = vmatpush2.bf16.msra.mxu0 0
      %1779 = vmatprep.subr.bf16.mxu0 0
      %1780 = vmatpush2.bf16.msra.mxu0 0
      %1781 = vmatprep.mubr.bf16.mxu0 0
      %1782 = vmatmul.mubr.bf16.gmra.mxu0 %v1662
      %v1783 = vpop.f32.mrf.mxu0
      %v1784 = vadd.f32 %v1711, %v1783
      %v1785 = vpop.f32.mrf.mxu0
      %v1786 = vpop.f32.mrf.mxu0
      %v1787 = vadd.f32 %v1714, %v1786
      %v1788 = vpop.f32.mrf.mxu0
      %1789 = vmatprep.mubr.bf16.mxu0 0
      %1790 = vmatmul.mubr.bf16.gmra.mxu0 %v1665
      %v1791 = vpop.f32.mrf.mxu0
      %v1792 = vadd.f32 %v1719, %v1791
      %v1793 = vpop.f32.mrf.mxu0
      %v1794 = vpop.f32.mrf.mxu0
      %v1795 = vadd.f32 %v1722, %v1794
      %v1796 = vpop.f32.mrf.mxu0
      %1797 = vmatprep.mubr.bf16.mxu0 0
      %1798 = vmatmul.mubr.bf16.gmra.mxu0 %v1668
      %v1799 = vpop.f32.mrf.mxu0
      %v1800 = vadd.f32 %v1727, %v1799
      %v1801 = vpop.f32.mrf.mxu0
      %v1802 = vpop.f32.mrf.mxu0
      %v1803 = vadd.f32 %v1730, %v1802
      %v1804 = vpop.f32.mrf.mxu0
      %1805 = vmatprep.mubr.bf16.mxu0 0
      %1806 = vmatmul.mubr.bf16.gmra.mxu0 %v1671
      %v1807 = vpop.f32.mrf.mxu0
      %v1808 = vadd.f32 %v1735, %v1807
      %v1809 = vpop.f32.mrf.mxu0
      %v1810 = vpop.f32.mrf.mxu0
      %v1811 = vadd.f32 %v1738, %v1810
      %v1812 = vpop.f32.mrf.mxu0
      %1813 = vmatprep.mubr.bf16.mxu0 0
      %1814 = vmatmul.mubr.bf16.gmra.mxu0 %v1674
      %v1815 = vpop.f32.mrf.mxu0
      %v1816 = vadd.f32 %v1743, %v1815
      %v1817 = vpop.f32.mrf.mxu0
      %v1818 = vpop.f32.mrf.mxu0
      %v1819 = vadd.f32 %v1746, %v1818
      %v1820 = vpop.f32.mrf.mxu0
      %1821 = vdwg.mxu0
      %v1822 = vxor.u32 %v1784, 2147483648
      %v1823 = vxor.u32 %v1787, 2147483648
      %v1824 = vxor.u32 %v1792, 2147483648
      %v1825 = vxor.u32 %v1795, 2147483648
      %v1826 = vxor.u32 %v1800, 2147483648
      %v1827 = vxor.u32 %v1803, 2147483648
      %v1828 = vxor.u32 %v1808, 2147483648
      %v1829 = vxor.u32 %v1811, 2147483648
      %v1830 = vxor.u32 %v1816, 2147483648
      %v1831 = vxor.u32 %v1819, 2147483648
      %v1832 = vmul.f32 %v1822, 1.442695
      %v1833 = vpow.pop %v1832
      %v1834 = vmul.f32 %v1823, 1.442695
      %v1835 = vpow.pop %v1834
      %v1836 = vmul.f32 %v1824, 1.442695
      %v1837 = vpow.pop %v1836
      %v1838 = vmul.f32 %v1825, 1.442695
      %v1839 = vpow.pop %v1838
      %v1840 = vmul.f32 %v1826, 1.442695
      %v1841 = vpow.pop %v1840
      %v1842 = vmul.f32 %v1827, 1.442695
      %v1843 = vpow.pop %v1842
      %v1844 = vmul.f32 %v1828, 1.442695
      %v1845 = vpow.pop %v1844
      %v1846 = vmul.f32 %v1829, 1.442695
      %v1847 = vpow.pop %v1846
      %v1848 = vmul.f32 %v1830, 1.442695
      %v1849 = vpow.pop %v1848
      %v1850 = vmul.f32 %v1831, 1.442695
      %v1851 = vpow.pop %v1850
      %v1852 = vadd.f32 %v1833, 1.0
      %v1853 = vadd.f32 %v1835, 1.0
      %v1854 = vadd.f32 %v1837, 1.0
      %v1855 = vadd.f32 %v1839, 1.0
      %v1856 = vadd.f32 %v1841, 1.0
      %v1857 = vadd.f32 %v1843, 1.0
      %v1858 = vadd.f32 %v1845, 1.0
      %v1859 = vadd.f32 %v1847, 1.0
      %v1860 = vadd.f32 %v1849, 1.0
      %v1861 = vadd.f32 %v1851, 1.0
      %v1862 = vrcp.pop %v1852
      %v1863 = vmul.f32 1.0, %v1862
      %v1864 = vrcp.pop %v1853
      %v1865 = vmul.f32 1.0, %v1864
      %v1866 = vrcp.pop %v1854
      %v1867 = vmul.f32 1.0, %v1866
      %v1868 = vrcp.pop %v1855
      %v1869 = vmul.f32 1.0, %v1868
      %v1870 = vrcp.pop %v1856
      %v1871 = vmul.f32 1.0, %v1870
      %v1872 = vrcp.pop %v1857
      %v1873 = vmul.f32 1.0, %v1872
      %v1874 = vrcp.pop %v1858
      %v1875 = vmul.f32 1.0, %v1874
      %v1876 = vrcp.pop %v1859
      %v1877 = vmul.f32 1.0, %v1876
      %v1878 = vrcp.pop %v1860
      %v1879 = vmul.f32 1.0, %v1878
      %v1880 = vrcp.pop %v1861
      %v1881 = vmul.f32 1.0, %v1880
      %1882 = vst [vmem:[%s343] sm:$0xff] %v1863
      %1883 = vst [vmem:[%s343 + $0x8] sm:$0xff] %v1865
      %1884 = vst [vmem:[%s343 + $0x10] sm:$0xff] %v1867
      %1885 = vst [vmem:[%s343 + $0x18] sm:$0xff] %v1869
      %1886 = vst [vmem:[%s343 + $0x20] sm:$0xff] %v1871
      %1887 = vst [vmem:[%s343 + $0x28] sm:$0xff] %v1873
      %1888 = vst [vmem:[%s343 + $0x30] sm:$0xff] %v1875
      %1889 = vst [vmem:[%s343 + $0x38] sm:$0xff] %v1877
      %1890 = vst [vmem:[%s343 + $0x40] sm:$0xff] %v1879
      %1891 = vst [vmem:[%s343 + $0x48] sm:$0xff] %v1881
      %p1892 = scmp.lt.s32.totalorder %s21, 1
      %s1893 = scalar_select %p1892, %s21, 1
      %s1894 = smul.addr %s1893, 8
      %s1895 = scalar_lea.vmem %s8, %s1894
      %p1896 = scmp.lt.s32.totalorder %s21, 1
      %s1897 = scalar_select %p1896, %s21, 1
      %s1898 = smul.addr %s1897, 10
      %s1899 = smul.addr %s1898, 8
      %s1900 = scalar_lea.vmem %s9, %s1899
      // Predicated region
      $region53: #{_model_forward.1} parent=51 // pred_check
        %p1901 = pneg %p212
      $region54: #{_model_forward.1} parent=51 // pred_check_branch
        %1903 = sbr.rel (%p1901) target = $region56
      $region55: #{_model_forward.1} parent=51 // pred_region
        _
      $region56: #{_model_forward.1} parent=51 // pred_fallthru
        _
      // Predicated region
      $region57: #{_model_forward.1} parent=51 // pred_check
        %p1904 = pneg %p238
      $region58: #{_model_forward.1} parent=51 // pred_check_branch
        %1906 = sbr.rel (%p1904) target = $region60
      $region59: #{_model_forward.1} parent=51 // pred_region
        _
      $region60: #{_model_forward.1} parent=51 // pred_fallthru
        _
    $region52: #{_model_forward.1} parent=5 // pred_fallthru
      _
    %p1907 = scmp.le.s32.totalorder 2, %s16
    // Predicated region
    $region61: #{_model_forward.1} parent=5 // pred_check
      %p1908 = pneg %p1907
    $region62: #{_model_forward.1} parent=5 // pred_check_branch
      %1910 = sbr.rel (%p1908) target = $region64
    $region63: #{_model_forward.1} parent=5 // pred_region
      %s1911 = ssub.s32 %s16, 2
      // Predicated region
      $region65: #{_model_forward.1} parent=63 // pred_check
        %p1912 = pneg %p218
      $region66: #{_model_forward.1} parent=63 // pred_check_branch
        %1914 = sbr.rel (%p1912) target = $region68
      $region67: #{_model_forward.1} parent=63 // pred_region
        %p1915 = scmp.lt.s32.totalorder %s22, 1
        %s1916 = scalar_select %p1915, %s22, 1
        %s1917 = smul.addr %s1916, 8
        %s1918 = scalar_lea.vmem %s8, %s1917
      $region68: #{_model_forward.1} parent=63 // pred_fallthru
        _
      // Predicated region
      $region69: #{_model_forward.1} parent=63 // pred_check
        %p1919 = pneg %p244
      $region70: #{_model_forward.1} parent=63 // pred_check_branch
        %1921 = sbr.rel (%p1919) target = $region72
      $region71: #{_model_forward.1} parent=63 // pred_region
        %p1922 = scmp.lt.s32.totalorder %s22, 1
        %s1923 = scalar_select %p1922, %s22, 1
        %s1924 = smul.addr %s1923, 10
        %s1925 = smul.addr %s1924, 8
        %s1926 = scalar_lea.vmem %s9, %s1925
      $region72: #{_model_forward.1} parent=63 // pred_fallthru
        _
    $region64: #{_model_forward.1} parent=5 // pred_fallthru
      _
  $region6: #{_model_forward.1} parent=0 // loop_footer
    %s20 = sadd.s32 1, %s16
  $region7: #{_model_forward.1} parent=0 // loop_footer_branch
    %15 = sbr.rel target = $region3
  $region8: #{_model_forward.1} parent=0 // loop_exit
    _

</llo_original>
